<compile_context>
chip_gen: v6e
topology: v6e:2x2x1
jax: 0.10.0
libtpu: 0.0.40
codegen_flags: <defaults>
</compile_context>

<pallas_src>
import functools

import jax
import jax.numpy as jnp
import numpy as np
from jax.experimental import pallas as pl
from jax.experimental.pallas import tpu as pltpu

EPS = 1e-5


# ----------------------------- fused kernel ----------------------------------
def _tcn_gcn_fused_kernel(x_ref, a_ref, wg_ref, wt_ref, wd_ref, b_ref,
                          o_ref, g_ref, *, V, use_down):
  """Graph contraction + channel mix + BN/ReLU + 9-tap temporal conv + residual.

  Lane-dense layout: last dim of every activation is T*V (t major, v minor).

  x_ref  : (1, C_in, T*V)        input block, bf16
  a_ref  : (K, T*V, T*V)         block-diagonal adjacency kron(I_T, A_k), bf16
  wg_ref : (K, C_out, C_in)      gcn 1x1 conv weights, BN scale folded
  wt_ref : (KT, C_out, C_out)    tcn temporal taps, BN scale folded
  wd_ref : (C_out, C_in)         down 1x1 conv weight, BN scale folded
  b_ref  : (3, C_out, 1)         folded biases [b_gcn, b_tcn, b_down], f32
  o_ref  : (1, C_out, T*V)       output, f32
  g_ref  : (C_out, (T+KT-1)*V)   VMEM scratch: temporally zero-padded gcn output
  """
  C_out = o_ref.shape[1]
  TV = o_ref.shape[2]
  K = a_ref.shape[0]
  KT = wt_ref.shape[0]
  pad_lanes = ((KT - 1) // 2) * V

  x2 = x_ref[0]                                            # (C_in, T*V) bf16

  # ---- unit_gcn: per adjacency partition, graph contraction then 1x1 mix ----
  # Contraction first (M = C_in <= C_out) keeps the big (TV, TV) matmul cheap.
  z = jnp.zeros((C_out, TV), jnp.float32)
  for k in range(K):                                       # K = 3 -> unrolled
    xa = jnp.dot(x2, a_ref[k], preferred_element_type=jnp.float32)   # (C_in, TV)
    z = z + jnp.dot(wg_ref[k], xa.astype(x2.dtype),
                    preferred_element_type=jnp.float32)
  z = jnp.maximum(z + b_ref[0], 0.0)                       # folded BN + ReLU

  # ---- temporally zero-padded copy of the gcn output in VMEM scratch --------
  # Zero only the 2*pad boundary columns; the body is overwritten just below.
  g_ref[:, :pad_lanes] = jnp.zeros((C_out, pad_lanes), g_ref.dtype)
  g_ref[:, pad_lanes + TV:] = jnp.zeros((C_out, pad_lanes), g_ref.dtype)
  g_ref[:, pad_lanes:pad_lanes + TV] = z.astype(g_ref.dtype)

  # ---- Unit2D temporal conv: one matmul per tap over a shifted view of g ----
  acc = jnp.zeros((C_out, TV), jnp.float32)
  for dt in range(KT):                                     # KT = 9 -> unrolled
    acc = acc + jnp.dot(wt_ref[dt], g_ref[:, dt * V:dt * V + TV],
                        preferred_element_type=jnp.float32)
  y = jnp.maximum(acc + b_ref[1], 0.0)                     # folded BN + ReLU

  # ---- residual branch -------------------------------------------------------
  if use_down:
    d = jnp.dot(wd_ref[...], x2, preferred_element_type=jnp.float32)
    d = jnp.maximum(d + b_ref[2], 0.0)
  else:
    d = x2.astype(jnp.float32)                             # identity (C_in == C_out)

  o_ref[0] = (y + d).astype(o_ref.dtype)


# ----------------------------- BN folding ------------------------------------
def _fold_bn(gamma, beta, mean, var, conv_bias):
  """Fold eval-mode BatchNorm (running stats) + preceding conv bias."""
  s = gamma / jnp.sqrt(var + EPS)
  b = s * (conv_bias - mean) + beta
  return s, b


# ----------------------------- wrapper ----------------------------------------
@functools.partial(jax.jit, static_argnames=("stride",))
def tcn_gcn_unit(x, p, stride=1):
  """Pallas forward of TCN_GCN_unit. x: (N, C_in, T, V) float32."""
  N, C_in, T, V = x.shape
  A = p["A"]
  K = A.shape[0]
  C_out = p["wg"].shape[1]
  KT = p["wt"].shape[-1]
  use_down = (C_in != C_out) or (stride != 1)
  assert stride == 1  # TODO(synk): temporal stride != 1 not implemented.

  bf16 = jnp.bfloat16
  TV = T * V

  # Fold eval-mode BN scales into conv weights; biases stay as (C_out, 1) adds.
  sg, bg = _fold_bn(*p["bn_g"], p["bg"].sum(0))   # gcn conv biases summed over k
  st, bt = _fold_bn(*p["bn_t"], p["bt"])
  sd, bd = _fold_bn(*p["bn_d"], p["bd"])

  wg_f = (sg[None, :, None] * p["wg"]).astype(bf16)                          # (K, C_out, C_in)
  wt_k = jnp.transpose(st[:, None, None] * p["wt"], (2, 0, 1)).astype(bf16)  # (KT, C_out, C_out)
  wd_f = (sd[:, None] * p["wd"]).astype(bf16)                                # (C_out, C_in)
  biases = jnp.stack([bg, bt, bd], 0)[:, :, None].astype(jnp.float32)        # (3, C_out, 1)

  # Block-diagonal adjacency: A~_k[t*V+u, s*V+v] = (t==s) * A_k[u, v].
  eye_t = jnp.eye(T, dtype=jnp.float32)
  a_blk = jnp.einsum("ts,kuv->ktusv", eye_t, A).reshape(K, TV, TV).astype(bf16)

  x_flat = x.astype(bf16).reshape(N, C_in, TV)     # lanes = (t, v), lane-dense

  kernel = functools.partial(_tcn_gcn_fused_kernel, V=V, use_down=use_down)
  out_flat = pl.pallas_call(
      kernel,
      out_shape=jax.ShapeDtypeStruct((N, C_out, TV), jnp.float32),
      grid=(N,),
      in_specs=[
          pl.BlockSpec((1, C_in, TV), lambda n: (n, 0, 0)),
          # Grid-invariant operands below are fetched once (index_map constant).
          pl.BlockSpec((K, TV, TV), lambda n: (0, 0, 0)),
          pl.BlockSpec((K, C_out, C_in), lambda n: (0, 0, 0)),
          pl.BlockSpec((KT, C_out, C_out), lambda n: (0, 0, 0)),
          pl.BlockSpec((C_out, C_in), lambda n: (0, 0)),
          pl.BlockSpec((3, C_out, 1), lambda n: (0, 0, 0)),
      ],
      out_specs=pl.BlockSpec((1, C_out, TV), lambda n: (n, 0, 0)),
      scratch_shapes=[pltpu.VMEM((C_out, (T + KT - 1) * V), bf16)],
      compiler_params=pltpu.CompilerParams(dimension_semantics=("parallel",)),
  )(x_flat, a_blk, wg_f, wt_k, wd_f, biases)

  return out_flat.reshape(N, C_out, T, V)


# ----------------------------- parameter init --------------------------------
def make_params(key, C_in, C_out, K, V, kt=9):
  ks = jax.random.split(key, 10)
  std = 0.1
  A = jax.random.uniform(ks[0], (K, V, V), jnp.float32)                  # adjacency partitions
  wg = std * jax.random.normal(ks[1], (K, C_out, C_in), jnp.float32)     # gcn 1x1 conv weights
  bg = std * jax.random.normal(ks[2], (K, C_out), jnp.float32)           # gcn conv biases
  wt = std * jax.random.normal(ks[3], (C_out, C_out, kt), jnp.float32)   # tcn (9,1) conv weight
  bt = std * jax.random.normal(ks[4], (C_out,), jnp.float32)
  wd = std * jax.random.normal(ks[5], (C_out, C_in), jnp.float32)        # down 1x1 conv weight
  bd = std * jax.random.normal(ks[6], (C_out,), jnp.float32)

  def bn(k):
    k1, k2, k3, k4 = jax.random.split(k, 4)
    gamma = 1.0 + 0.1 * jax.random.normal(k1, (C_out,), jnp.float32)
    beta = 0.1 * jax.random.normal(k2, (C_out,), jnp.float32)
    mean = 0.1 * jax.random.normal(k3, (C_out,), jnp.float32)
    var = jax.random.uniform(k4, (C_out,), jnp.float32, minval=0.5, maxval=1.5)
    return gamma, beta, mean, var

  return dict(A=A, wg=wg, bg=bg, wt=wt, bt=bt, wd=wd, bd=bd,
              bn_g=bn(ks[7]), bn_t=bn(ks[8]), bn_d=bn(ks[9]))


# ----------------------------- pure-JAX reference ----------------------------
def _bn_relu(x, gamma, beta, mean, var):
  s = gamma / jnp.sqrt(var + EPS)
  return jnp.maximum(s[None, :, None, None] * (x - mean[None, :, None, None])
                     + beta[None, :, None, None], 0.0)


def reference_forward(x, p, use_down=True):
  A = p["A"]
  K = A.shape[0]
  N, C_in, T, V = x.shape
  C_out = p["wg"].shape[1]
  kt = p["wt"].shape[-1]
  pad = (kt - 1) // 2

  # unit_gcn
  z = jnp.zeros((N, C_out, T, V), jnp.float32)
  for k in range(K):
    xa = jnp.einsum("nctu,uv->nctv", x, A[k])
    z = z + jnp.einsum("oc,nctv->notv", p["wg"][k], xa) + p["bg"][k][None, :, None, None]
  g = _bn_relu(z, *p["bn_g"])

  # Unit2D tcn
  gp = jnp.pad(g, ((0, 0), (0, 0), (pad, pad), (0, 0)))
  y = jnp.zeros((N, C_out, T, V), jnp.float32)
  for dt in range(kt):
    y = y + jnp.einsum("oc,nctv->notv", p["wt"][:, :, dt], gp[:, :, dt:dt + T, :])
  y = _bn_relu(y + p["bt"][None, :, None, None], *p["bn_t"])

  # residual branch
  if use_down:
    d = jnp.einsum("oc,nctv->notv", p["wd"], x) + p["bd"][None, :, None, None]
    d = _bn_relu(d, *p["bn_d"])
  else:
    d = x
  return y + d


if __name__ == "__main__":
  N, C_in, C_out, T, V, K, KT = 2, 4, 8, 16, 16, 3, 9
  key = jax.random.PRNGKey(0)
  kx, kp = jax.random.split(key)
  x = jax.random.normal(kx, (N, C_in, T, V), jnp.float32)
  params = make_params(kp, C_in, C_out, K, V, KT)

  out = jax.block_until_ready(tcn_gcn_unit(x, params))

  ref = reference_forward(x, params, use_down=(C_in != C_out))
  np.testing.assert_allclose(np.asarray(out), np.asarray(ref), rtol=5e-2, atol=5e-2)
  assert out.shape == (N, C_out, T, V)
  print("KERNEL_OK")
</pallas_src>

<mosaic_0001>
module attributes {stable_mosaic.version = 11 : i64} {
  func.func @_tcn_gcn_fused_kernel(%arg0: i32, %arg1: memref<1x4x256xbf16, #tpu.memory_space<vmem>>, %arg2: memref<3x256x256xbf16, #tpu.memory_space<vmem>>, %arg3: memref<3x8x4xbf16, #tpu.memory_space<vmem>>, %arg4: memref<9x8x8xbf16, #tpu.memory_space<vmem>>, %arg5: memref<8x4xbf16, #tpu.memory_space<vmem>>, %arg6: memref<3x8x1xf32, #tpu.memory_space<vmem>>, %arg7: memref<1x8x256xf32, #tpu.memory_space<vmem>>, %arg8: memref<8x384xbf16, #tpu.memory_space<vmem>>) attributes {dimension_semantics = [#tpu.dimension_semantics<parallel>], iteration_bounds = array<i64: 2>, scalar_prefetch = 0 : i64, scratch_operands = 1 : i64, tpu.core_type = #tpu.core_type<tc>, window_params = [{transform_indices = @transform_0, window_bounds = array<i64: 1, 4, 256>}, {pipeline_mode = #tpu.pipeline_mode<synchronous>, transform_indices = @transform_1, window_bounds = array<i64: 3, 256, 256>}, {pipeline_mode = #tpu.pipeline_mode<synchronous>, transform_indices = @transform_2, window_bounds = array<i64: 3, 8, 4>}, {pipeline_mode = #tpu.pipeline_mode<synchronous>, transform_indices = @transform_3, window_bounds = array<i64: 9, 8, 8>}, {pipeline_mode = #tpu.pipeline_mode<synchronous>, transform_indices = @transform_4, window_bounds = array<i64: 8, 4>}, {pipeline_mode = #tpu.pipeline_mode<synchronous>, transform_indices = @transform_5, window_bounds = array<i64: 3, 8, 1>}, {transform_indices = @transform_6, window_bounds = array<i64: 1, 8, 256>}]} {
    %c0 = arith.constant 0 : index
    %c0_0 = arith.constant 0 : index
    %c0_1 = arith.constant 0 : index
    %0 = vector.load %arg1[%c0, %c0_0, %c0_1] : memref<1x4x256xbf16, #tpu.memory_space<vmem>>, vector<1x4x256xbf16>
    %1 = vector.shape_cast %0 : vector<1x4x256xbf16> to vector<4x256xbf16>
    %cst = arith.constant 0.000000e+00 : f32
    %2 = vector.broadcast %cst : f32 to vector<8x256xf32>
    %c0_2 = arith.constant 0 : index
    %c0_3 = arith.constant 0 : index
    %c0_4 = arith.constant 0 : index
    %3 = vector.load %arg2[%c0_2, %c0_3, %c0_4] : memref<3x256x256xbf16, #tpu.memory_space<vmem>>, vector<1x256x256xbf16>
    %4 = vector.shape_cast %3 : vector<1x256x256xbf16> to vector<256x256xbf16>
    %cst_5 = arith.constant dense<0.000000e+00> : vector<4x256xf32>
    %5 = tpu.matmul %1, %4, %cst_5 {dimension_numbers = #tpu.dot_dimension_numbers<[1], [0], [0], [1], [0, 0, 1, 1], [], []>} : vector<4x256xbf16>, vector<256x256xbf16>, vector<4x256xf32> -> vector<4x256xf32>
    %c0_6 = arith.constant 0 : index
    %c0_7 = arith.constant 0 : index
    %c0_8 = arith.constant 0 : index
    %6 = vector.load %arg3[%c0_6, %c0_7, %c0_8] : memref<3x8x4xbf16, #tpu.memory_space<vmem>>, vector<1x8x4xbf16>
    %7 = vector.shape_cast %6 : vector<1x8x4xbf16> to vector<8x4xbf16>
    %8 = arith.truncf %5 : vector<4x256xf32> to vector<4x256xbf16>
    %cst_9 = arith.constant dense<0.000000e+00> : vector<8x256xf32>
    %9 = tpu.matmul %7, %8, %cst_9 {dimension_numbers = #tpu.dot_dimension_numbers<[1], [0], [0], [1], [0, 0, 1, 1], [], []>} : vector<8x4xbf16>, vector<4x256xbf16>, vector<8x256xf32> -> vector<8x256xf32>
    %10 = arith.addf %2, %9 : vector<8x256xf32>
    %c1 = arith.constant 1 : index
    %c0_10 = arith.constant 0 : index
    %c0_11 = arith.constant 0 : index
    %11 = vector.load %arg2[%c1, %c0_10, %c0_11] : memref<3x256x256xbf16, #tpu.memory_space<vmem>>, vector<1x256x256xbf16>
    %12 = vector.shape_cast %11 : vector<1x256x256xbf16> to vector<256x256xbf16>
    %cst_12 = arith.constant dense<0.000000e+00> : vector<4x256xf32>
    %13 = tpu.matmul %1, %12, %cst_12 {dimension_numbers = #tpu.dot_dimension_numbers<[1], [0], [0], [1], [0, 0, 1, 1], [], []>} : vector<4x256xbf16>, vector<256x256xbf16>, vector<4x256xf32> -> vector<4x256xf32>
    %c1_13 = arith.constant 1 : index
    %c0_14 = arith.constant 0 : index
    %c0_15 = arith.constant 0 : index
    %14 = vector.load %arg3[%c1_13, %c0_14, %c0_15] : memref<3x8x4xbf16, #tpu.memory_space<vmem>>, vector<1x8x4xbf16>
    %15 = vector.shape_cast %14 : vector<1x8x4xbf16> to vector<8x4xbf16>
    %16 = arith.truncf %13 : vector<4x256xf32> to vector<4x256xbf16>
    %cst_16 = arith.constant dense<0.000000e+00> : vector<8x256xf32>
    %17 = tpu.matmul %15, %16, %cst_16 {dimension_numbers = #tpu.dot_dimension_numbers<[1], [0], [0], [1], [0, 0, 1, 1], [], []>} : vector<8x4xbf16>, vector<4x256xbf16>, vector<8x256xf32> -> vector<8x256xf32>
    %18 = arith.addf %10, %17 : vector<8x256xf32>
    %c2 = arith.constant 2 : index
    %c0_17 = arith.constant 0 : index
    %c0_18 = arith.constant 0 : index
    %19 = vector.load %arg2[%c2, %c0_17, %c0_18] : memref<3x256x256xbf16, #tpu.memory_space<vmem>>, vector<1x256x256xbf16>
    %20 = vector.shape_cast %19 : vector<1x256x256xbf16> to vector<256x256xbf16>
    %cst_19 = arith.constant dense<0.000000e+00> : vector<4x256xf32>
    %21 = tpu.matmul %1, %20, %cst_19 {dimension_numbers = #tpu.dot_dimension_numbers<[1], [0], [0], [1], [0, 0, 1, 1], [], []>} : vector<4x256xbf16>, vector<256x256xbf16>, vector<4x256xf32> -> vector<4x256xf32>
    %c2_20 = arith.constant 2 : index
    %c0_21 = arith.constant 0 : index
    %c0_22 = arith.constant 0 : index
    %22 = vector.load %arg3[%c2_20, %c0_21, %c0_22] : memref<3x8x4xbf16, #tpu.memory_space<vmem>>, vector<1x8x4xbf16>
    %23 = vector.shape_cast %22 : vector<1x8x4xbf16> to vector<8x4xbf16>
    %24 = arith.truncf %21 : vector<4x256xf32> to vector<4x256xbf16>
    %cst_23 = arith.constant dense<0.000000e+00> : vector<8x256xf32>
    %25 = tpu.matmul %23, %24, %cst_23 {dimension_numbers = #tpu.dot_dimension_numbers<[1], [0], [0], [1], [0, 0, 1, 1], [], []>} : vector<8x4xbf16>, vector<4x256xbf16>, vector<8x256xf32> -> vector<8x256xf32>
    %26 = arith.addf %18, %25 : vector<8x256xf32>
    %c0_24 = arith.constant 0 : index
    %c0_25 = arith.constant 0 : index
    %c0_26 = arith.constant 0 : index
    %27 = vector.load %arg6[%c0_24, %c0_25, %c0_26] : memref<3x8x1xf32, #tpu.memory_space<vmem>>, vector<1x8x1xf32>
    %28 = vector.shape_cast %27 : vector<1x8x1xf32> to vector<8x1xf32>
    %29 = vector.broadcast %28 : vector<8x1xf32> to vector<8x256xf32>
    %30 = arith.addf %26, %29 : vector<8x256xf32>
    %cst_27 = arith.constant 0.000000e+00 : f32
    %31 = vector.broadcast %cst_27 : f32 to vector<8x256xf32>
    %32 = arith.maximumf %30, %31 : vector<8x256xf32>
    %cst_28 = arith.constant 0.000000e+00 : bf16
    %33 = vector.broadcast %cst_28 : bf16 to vector<8x64xbf16>
    %c0_29 = arith.constant 0 : index
    %c0_30 = arith.constant 0 : index
    %34 = vector.load %arg8[%c0_29, %c0_30] : memref<8x384xbf16, #tpu.memory_space<vmem>>, vector<8x64xbf16>
    tpu.vector_store %arg8[%c0_29, %c0_30], %33 {strides = array<i32>} : memref<8x384xbf16, #tpu.memory_space<vmem>>, vector<8x64xbf16>,
    %cst_31 = arith.constant 0.000000e+00 : bf16
    %35 = vector.broadcast %cst_31 : bf16 to vector<8x64xbf16>
    %c0_32 = arith.constant 0 : index
    %c320 = arith.constant 320 : index
    %36 = vector.load %arg8[%c0_32, %c320] : memref<8x384xbf16, #tpu.memory_space<vmem>>, vector<8x64xbf16>
    tpu.vector_store %arg8[%c0_32, %c320], %35 {strides = array<i32>} : memref<8x384xbf16, #tpu.memory_space<vmem>>, vector<8x64xbf16>,
    %37 = arith.truncf %32 : vector<8x256xf32> to vector<8x256xbf16>
    %c0_33 = arith.constant 0 : index
    %c64 = arith.constant 64 : index
    %38 = vector.load %arg8[%c0_33, %c64] : memref<8x384xbf16, #tpu.memory_space<vmem>>, vector<8x256xbf16>
    tpu.vector_store %arg8[%c0_33, %c64], %37 {strides = array<i32>} : memref<8x384xbf16, #tpu.memory_space<vmem>>, vector<8x256xbf16>,
    %cst_34 = arith.constant 0.000000e+00 : f32
    %39 = vector.broadcast %cst_34 : f32 to vector<8x256xf32>
    %c0_35 = arith.constant 0 : index
    %c0_36 = arith.constant 0 : index
    %c0_37 = arith.constant 0 : index
    %40 = vector.load %arg4[%c0_35, %c0_36, %c0_37] : memref<9x8x8xbf16, #tpu.memory_space<vmem>>, vector<1x8x8xbf16>
    %41 = vector.shape_cast %40 : vector<1x8x8xbf16> to vector<8x8xbf16>
    %c0_38 = arith.constant 0 : index
    %c0_39 = arith.constant 0 : index
    %42 = vector.load %arg8[%c0_38, %c0_39] : memref<8x384xbf16, #tpu.memory_space<vmem>>, vector<8x256xbf16>
    %cst_40 = arith.constant dense<0.000000e+00> : vector<8x256xf32>
    %43 = tpu.matmul %41, %42, %cst_40 {dimension_numbers = #tpu.dot_dimension_numbers<[1], [0], [0], [1], [0, 0, 1, 1], [], []>} : vector<8x8xbf16>, vector<8x256xbf16>, vector<8x256xf32> -> vector<8x256xf32>
    %44 = arith.addf %39, %43 : vector<8x256xf32>
    %c1_41 = arith.constant 1 : index
    %c0_42 = arith.constant 0 : index
    %c0_43 = arith.constant 0 : index
    %45 = vector.load %arg4[%c1_41, %c0_42, %c0_43] : memref<9x8x8xbf16, #tpu.memory_space<vmem>>, vector<1x8x8xbf16>
    %46 = vector.shape_cast %45 : vector<1x8x8xbf16> to vector<8x8xbf16>
    %c0_44 = arith.constant 0 : index
    %c16 = arith.constant 16 : index
    %47 = vector.load %arg8[%c0_44, %c16] : memref<8x384xbf16, #tpu.memory_space<vmem>>, vector<8x256xbf16>
    %cst_45 = arith.constant dense<0.000000e+00> : vector<8x256xf32>
    %48 = tpu.matmul %46, %47, %cst_45 {dimension_numbers = #tpu.dot_dimension_numbers<[1], [0], [0], [1], [0, 0, 1, 1], [], []>} : vector<8x8xbf16>, vector<8x256xbf16>, vector<8x256xf32> -> vector<8x256xf32>
    %49 = arith.addf %44, %48 : vector<8x256xf32>
    %c2_46 = arith.constant 2 : index
    %c0_47 = arith.constant 0 : index
    %c0_48 = arith.constant 0 : index
    %50 = vector.load %arg4[%c2_46, %c0_47, %c0_48] : memref<9x8x8xbf16, #tpu.memory_space<vmem>>, vector<1x8x8xbf16>
    %51 = vector.shape_cast %50 : vector<1x8x8xbf16> to vector<8x8xbf16>
    %c0_49 = arith.constant 0 : index
    %c32 = arith.constant 32 : index
    %52 = vector.load %arg8[%c0_49, %c32] : memref<8x384xbf16, #tpu.memory_space<vmem>>, vector<8x256xbf16>
    %cst_50 = arith.constant dense<0.000000e+00> : vector<8x256xf32>
    %53 = tpu.matmul %51, %52, %cst_50 {dimension_numbers = #tpu.dot_dimension_numbers<[1], [0], [0], [1], [0, 0, 1, 1], [], []>} : vector<8x8xbf16>, vector<8x256xbf16>, vector<8x256xf32> -> vector<8x256xf32>
    %54 = arith.addf %49, %53 : vector<8x256xf32>
    %c3 = arith.constant 3 : index
    %c0_51 = arith.constant 0 : index
    %c0_52 = arith.constant 0 : index
    %55 = vector.load %arg4[%c3, %c0_51, %c0_52] : memref<9x8x8xbf16, #tpu.memory_space<vmem>>, vector<1x8x8xbf16>
    %56 = vector.shape_cast %55 : vector<1x8x8xbf16> to vector<8x8xbf16>
    %c0_53 = arith.constant 0 : index
    %c48 = arith.constant 48 : index
    %57 = vector.load %arg8[%c0_53, %c48] : memref<8x384xbf16, #tpu.memory_space<vmem>>, vector<8x256xbf16>
    %cst_54 = arith.constant dense<0.000000e+00> : vector<8x256xf32>
    %58 = tpu.matmul %56, %57, %cst_54 {dimension_numbers = #tpu.dot_dimension_numbers<[1], [0], [0], [1], [0, 0, 1, 1], [], []>} : vector<8x8xbf16>, vector<8x256xbf16>, vector<8x256xf32> -> vector<8x256xf32>
    %59 = arith.addf %54, %58 : vector<8x256xf32>
    %c4 = arith.constant 4 : index
    %c0_55 = arith.constant 0 : index
    %c0_56 = arith.constant 0 : index
    %60 = vector.load %arg4[%c4, %c0_55, %c0_56] : memref<9x8x8xbf16, #tpu.memory_space<vmem>>, vector<1x8x8xbf16>
    %61 = vector.shape_cast %60 : vector<1x8x8xbf16> to vector<8x8xbf16>
    %c0_57 = arith.constant 0 : index
    %c64_58 = arith.constant 64 : index
    %62 = vector.load %arg8[%c0_57, %c64_58] : memref<8x384xbf16, #tpu.memory_space<vmem>>, vector<8x256xbf16>
    %cst_59 = arith.constant dense<0.000000e+00> : vector<8x256xf32>
    %63 = tpu.matmul %61, %62, %cst_59 {dimension_numbers = #tpu.dot_dimension_numbers<[1], [0], [0], [1], [0, 0, 1, 1], [], []>} : vector<8x8xbf16>, vector<8x256xbf16>, vector<8x256xf32> -> vector<8x256xf32>
    %64 = arith.addf %59, %63 : vector<8x256xf32>
    %c5 = arith.constant 5 : index
    %c0_60 = arith.constant 0 : index
    %c0_61 = arith.constant 0 : index
    %65 = vector.load %arg4[%c5, %c0_60, %c0_61] : memref<9x8x8xbf16, #tpu.memory_space<vmem>>, vector<1x8x8xbf16>
    %66 = vector.shape_cast %65 : vector<1x8x8xbf16> to vector<8x8xbf16>
    %c0_62 = arith.constant 0 : index
    %c80 = arith.constant 80 : index
    %67 = vector.load %arg8[%c0_62, %c80] : memref<8x384xbf16, #tpu.memory_space<vmem>>, vector<8x256xbf16>
    %cst_63 = arith.constant dense<0.000000e+00> : vector<8x256xf32>
    %68 = tpu.matmul %66, %67, %cst_63 {dimension_numbers = #tpu.dot_dimension_numbers<[1], [0], [0], [1], [0, 0, 1, 1], [], []>} : vector<8x8xbf16>, vector<8x256xbf16>, vector<8x256xf32> -> vector<8x256xf32>
    %69 = arith.addf %64, %68 : vector<8x256xf32>
    %c6 = arith.constant 6 : index
    %c0_64 = arith.constant 0 : index
    %c0_65 = arith.constant 0 : index
    %70 = vector.load %arg4[%c6, %c0_64, %c0_65] : memref<9x8x8xbf16, #tpu.memory_space<vmem>>, vector<1x8x8xbf16>
    %71 = vector.shape_cast %70 : vector<1x8x8xbf16> to vector<8x8xbf16>
    %c0_66 = arith.constant 0 : index
    %c96 = arith.constant 96 : index
    %72 = vector.load %arg8[%c0_66, %c96] : memref<8x384xbf16, #tpu.memory_space<vmem>>, vector<8x256xbf16>
    %cst_67 = arith.constant dense<0.000000e+00> : vector<8x256xf32>
    %73 = tpu.matmul %71, %72, %cst_67 {dimension_numbers = #tpu.dot_dimension_numbers<[1], [0], [0], [1], [0, 0, 1, 1], [], []>} : vector<8x8xbf16>, vector<8x256xbf16>, vector<8x256xf32> -> vector<8x256xf32>
    %74 = arith.addf %69, %73 : vector<8x256xf32>
    %c7 = arith.constant 7 : index
    %c0_68 = arith.constant 0 : index
    %c0_69 = arith.constant 0 : index
    %75 = vector.load %arg4[%c7, %c0_68, %c0_69] : memref<9x8x8xbf16, #tpu.memory_space<vmem>>, vector<1x8x8xbf16>
    %76 = vector.shape_cast %75 : vector<1x8x8xbf16> to vector<8x8xbf16>
    %c0_70 = arith.constant 0 : index
    %c112 = arith.constant 112 : index
    %77 = vector.load %arg8[%c0_70, %c112] : memref<8x384xbf16, #tpu.memory_space<vmem>>, vector<8x256xbf16>
    %cst_71 = arith.constant dense<0.000000e+00> : vector<8x256xf32>
    %78 = tpu.matmul %76, %77, %cst_71 {dimension_numbers = #tpu.dot_dimension_numbers<[1], [0], [0], [1], [0, 0, 1, 1], [], []>} : vector<8x8xbf16>, vector<8x256xbf16>, vector<8x256xf32> -> vector<8x256xf32>
    %79 = arith.addf %74, %78 : vector<8x256xf32>
    %c8 = arith.constant 8 : index
    %c0_72 = arith.constant 0 : index
    %c0_73 = arith.constant 0 : index
    %80 = vector.load %arg4[%c8, %c0_72, %c0_73] : memref<9x8x8xbf16, #tpu.memory_space<vmem>>, vector<1x8x8xbf16>
    %81 = vector.shape_cast %80 : vector<1x8x8xbf16> to vector<8x8xbf16>
    %c0_74 = arith.constant 0 : index
    %c128 = arith.constant 128 : index
    %82 = vector.load %arg8[%c0_74, %c128] : memref<8x384xbf16, #tpu.memory_space<vmem>>, vector<8x256xbf16>
    %cst_75 = arith.constant dense<0.000000e+00> : vector<8x256xf32>
    %83 = tpu.matmul %81, %82, %cst_75 {dimension_numbers = #tpu.dot_dimension_numbers<[1], [0], [0], [1], [0, 0, 1, 1], [], []>} : vector<8x8xbf16>, vector<8x256xbf16>, vector<8x256xf32> -> vector<8x256xf32>
    %84 = arith.addf %79, %83 : vector<8x256xf32>
    %c1_76 = arith.constant 1 : index
    %c0_77 = arith.constant 0 : index
    %c0_78 = arith.constant 0 : index
    %85 = vector.load %arg6[%c1_76, %c0_77, %c0_78] : memref<3x8x1xf32, #tpu.memory_space<vmem>>, vector<1x8x1xf32>
    %86 = vector.shape_cast %85 : vector<1x8x1xf32> to vector<8x1xf32>
    %87 = vector.broadcast %86 : vector<8x1xf32> to vector<8x256xf32>
    %88 = arith.addf %84, %87 : vector<8x256xf32>
    %cst_79 = arith.constant 0.000000e+00 : f32
    %89 = vector.broadcast %cst_79 : f32 to vector<8x256xf32>
    %90 = arith.maximumf %88, %89 : vector<8x256xf32>
    %c0_80 = arith.constant 0 : index
    %c0_81 = arith.constant 0 : index
    %91 = vector.load %arg5[%c0_80, %c0_81] : memref<8x4xbf16, #tpu.memory_space<vmem>>, vector<8x4xbf16>
    %cst_82 = arith.constant dense<0.000000e+00> : vector<8x256xf32>
    %92 = tpu.matmul %91, %1, %cst_82 {dimension_numbers = #tpu.dot_dimension_numbers<[1], [0], [0], [1], [0, 0, 1, 1], [], []>} : vector<8x4xbf16>, vector<4x256xbf16>, vector<8x256xf32> -> vector<8x256xf32>
    %c2_83 = arith.constant 2 : index
    %c0_84 = arith.constant 0 : index
    %c0_85 = arith.constant 0 : index
    %93 = vector.load %arg6[%c2_83, %c0_84, %c0_85] : memref<3x8x1xf32, #tpu.memory_space<vmem>>, vector<1x8x1xf32>
    %94 = vector.shape_cast %93 : vector<1x8x1xf32> to vector<8x1xf32>
    %95 = vector.broadcast %94 : vector<8x1xf32> to vector<8x256xf32>
    %96 = arith.addf %92, %95 : vector<8x256xf32>
    %cst_86 = arith.constant 0.000000e+00 : f32
    %97 = vector.broadcast %cst_86 : f32 to vector<8x256xf32>
    %98 = arith.maximumf %96, %97 : vector<8x256xf32>
    %99 = arith.addf %90, %98 : vector<8x256xf32>
    %c0_87 = arith.constant 0 : index
    %c0_88 = arith.constant 0 : index
    %c0_89 = arith.constant 0 : index
    %100 = vector.load %arg7[%c0_87, %c0_88, %c0_89] : memref<1x8x256xf32, #tpu.memory_space<vmem>>, vector<1x8x256xf32>
    %101 = vector.shape_cast %100 : vector<1x8x256xf32> to vector<8x256xf32>
    %102 = vector.shape_cast %99 : vector<8x256xf32> to vector<1x8x256xf32>
    tpu.vector_store %arg7[%c0_87, %c0_88, %c0_89], %102 {strides = array<i32>} : memref<1x8x256xf32, #tpu.memory_space<vmem>>, vector<1x8x256xf32>,
    return
  }
  func.func @transform_0(%arg0: i32) -> (i32, i32, i32) {
    %c0_i32 = arith.constant 0 : i32
    %c0_i32_0 = arith.constant 0 : i32
    %c0_i32_1 = arith.constant 0 : i32
    return %arg0, %c0_i32, %c0_i32_0 : i32, i32, i32
  }
  func.func @transform_1(%arg0: i32) -> (i32, i32, i32) {
    %c0_i32 = arith.constant 0 : i32
    %c0_i32_0 = arith.constant 0 : i32
    %c0_i32_1 = arith.constant 0 : i32
    %c0_i32_2 = arith.constant 0 : i32
    return %c0_i32, %c0_i32_0, %c0_i32_1 : i32, i32, i32
  }
  func.func @transform_2(%arg0: i32) -> (i32, i32, i32) {
    %c0_i32 = arith.constant 0 : i32
    %c0_i32_0 = arith.constant 0 : i32
    %c0_i32_1 = arith.constant 0 : i32
    %c0_i32_2 = arith.constant 0 : i32
    return %c0_i32, %c0_i32_0, %c0_i32_1 : i32, i32, i32
  }
  func.func @transform_3(%arg0: i32) -> (i32, i32, i32) {
    %c0_i32 = arith.constant 0 : i32
    %c0_i32_0 = arith.constant 0 : i32
    %c0_i32_1 = arith.constant 0 : i32
    %c0_i32_2 = arith.constant 0 : i32
    return %c0_i32, %c0_i32_0, %c0_i32_1 : i32, i32, i32
  }
  func.func @transform_4(%arg0: i32) -> (i32, i32) {
    %c0_i32 = arith.constant 0 : i32
    %c0_i32_0 = arith.constant 0 : i32
    %c0_i32_1 = arith.constant 0 : i32
    return %c0_i32, %c0_i32_0 : i32, i32
  }
  func.func @transform_5(%arg0: i32) -> (i32, i32, i32) {
    %c0_i32 = arith.constant 0 : i32
    %c0_i32_0 = arith.constant 0 : i32
    %c0_i32_1 = arith.constant 0 : i32
    %c0_i32_2 = arith.constant 0 : i32
    return %c0_i32, %c0_i32_0, %c0_i32_1 : i32, i32, i32
  }
  func.func @transform_6(%arg0: i32) -> (i32, i32, i32) {
    %c0_i32 = arith.constant 0 : i32
    %c0_i32_0 = arith.constant 0 : i32
    %c0_i32_1 = arith.constant 0 : i32
    return %arg0, %c0_i32, %c0_i32_0 : i32, i32, i32
  }
}

</mosaic_0001>

<llo_original>
// kernel: tcn_gcn_unit.1
$region0: #{tcn_gcn_unit.1}
  #allocation0 [shape = 'u32[]', space=smem, size = 0x4, offset = 0x4, fixed_abs, tag = 'smem constant byte address 0x4 - core index']
  #allocation1 [shape = 'u32[144,128]{1,0:T(1,128)}', space=vmem, size = 0x12000, scoped, tag = 'internal scratch']
  #allocation2 [shape = 'bf16[8,384]{1,0:T(8,128)(2,1)}', space=vmem, size = 0x1800, scoped, tag = 'scratch operand']
  %s0 = inlined_call_operand.vmem [shape: bf16[2,4,256], index: 0, kind: input, shape index: {}]
  %s1 = inlined_call_operand.vmem [shape: bf16[3,256,256], index: 1, kind: input, shape index: {}]
  %s2 = inlined_call_operand.vmem [shape: bf16[3,8,4], index: 2, kind: input, shape index: {}]
  %s3 = inlined_call_operand.vmem [shape: bf16[9,8,8], index: 3, kind: input, shape index: {}]
  %s4 = inlined_call_operand.vmem [shape: bf16[8,4], index: 4, kind: input, shape index: {}]
  %s5 = inlined_call_operand.vmem [shape: f32[3,8,1], index: 5, kind: input, shape index: {}]
  %s6 = inlined_call_operand.vmem [shape: f32[2,8,256], index: 6, kind: output, shape index: {}]
  %s7 = sld [smem:[#allocation0]]
  $region57: #{tcn_gcn_unit.1} parent=0
    _
  %s9 = ssub.s32 1, %s7
  %s10 = scalar_select 0, %s9, %s7
  loop: start=0, step=1, limit=4
  $region2: #{tcn_gcn_unit.1} parent=0 // loop_pre_header
    _
  $region3: #{tcn_gcn_unit.1} parent=0 // loop_header
    %s12 = sphi 0, %s16
    %p13 = scmp.ge.s32.totalorder %s12, 4
    %s22 = sphi 0, %s24
    %s25 = sphi 0, %s22
    %s26 = sphi 0, %s25
    %s42 = sphi 0, %s26
    %s46 = sphi 0, %s46
    %s48 = sphi 0, %s46
    %s49 = sphi 0, %s48
    %s63 = sphi 0, %s49
    %s67 = sphi 0, %s67
    %s69 = sphi 0, %s67
    %s70 = sphi 0, %s69
    %s84 = sphi 0, %s70
    %s88 = sphi 0, %s88
    %s90 = sphi 0, %s88
    %s91 = sphi 0, %s90
    %s105 = sphi 0, %s91
    %s109 = sphi 0, %s109
    %s111 = sphi 0, %s109
    %s112 = sphi 0, %s111
    %s126 = sphi 0, %s112
    %s130 = sphi 0, %s130
    %s132 = sphi 0, %s130
    %s133 = sphi 0, %s132
    %s147 = sphi 0, %s133
    %s153 = sphi 0, %s155
    %s156 = sphi 0, %s153
    %s157 = sphi 0, %s156
    %s173 = sphi 0, %s157
  $region4: #{tcn_gcn_unit.1} parent=0 // loop_header_branch
    %15 = sbr.rel (%p13) target = $region8
  $region5: #{tcn_gcn_unit.1} parent=0 // loop_body
    %s17 = ssub.s32 %s12, 1
    %s18 = ssub.s32 %s12, 2
    %s19 = sadd.s32 %s12, 1
    %s20 = ssub.s32 %s12, %s19
    %p21 = scmp.eq.s32.totalorder %s20, 0
    %s23 = sadd.s32 %s22, 1
    %s24 = scalar_select %p21, %s22, %s23
    %p27 = pneg %p21
    %p28 = scmp.eq.s32.totalorder %s12, 1
    %p29 = por %p27, %p28
    %p30 = scmp.ne.s32.totalorder %s22, %s25
    %p31 = scmp.eq.s32.totalorder %s12, 0
    %p32 = por %p30, %p31
    %p33 = scmp.ne.s32.totalorder %s22, %s25
    %p34 = scmp.eq.s32.totalorder %s17, 1
    %p35 = por %p33, %p34
    %p36 = scmp.ne.s32.totalorder %s25, %s26
    %p37 = scmp.eq.s32.totalorder %s17, 0
    %p38 = por %p36, %p37
    %p39 = scmp.ne.s32.totalorder %s25, %s26
    %p40 = scmp.eq.s32.totalorder %s18, 1
    %p41 = por %p39, %p40
    %p43 = scmp.ne.s32.totalorder %s26, %s42
    %p44 = scmp.eq.s32.totalorder %s18, 0
    %p45 = por %p43, %p44
    %s47 = sadd.s32 %s46, 1
    %p50 = scmp.eq.s32.totalorder %s12, 1
    %p51 = scmp.ne.s32.totalorder %s46, %s48
    %p52 = scmp.eq.s32.totalorder %s12, 0
    %p53 = por %p51, %p52
    %p54 = scmp.ne.s32.totalorder %s46, %s48
    %p55 = scmp.eq.s32.totalorder %s17, 1
    %p56 = por %p54, %p55
    %p57 = scmp.ne.s32.totalorder %s48, %s49
    %p58 = scmp.eq.s32.totalorder %s17, 0
    %p59 = por %p57, %p58
    %p60 = scmp.ne.s32.totalorder %s48, %s49
    %p61 = scmp.eq.s32.totalorder %s18, 1
    %p62 = por %p60, %p61
    %p64 = scmp.ne.s32.totalorder %s49, %s63
    %p65 = scmp.eq.s32.totalorder %s18, 0
    %p66 = por %p64, %p65
    %s68 = sadd.s32 %s67, 1
    %p71 = scmp.eq.s32.totalorder %s12, 1
    %p72 = scmp.ne.s32.totalorder %s67, %s69
    %p73 = scmp.eq.s32.totalorder %s12, 0
    %p74 = por %p72, %p73
    %p75 = scmp.ne.s32.totalorder %s67, %s69
    %p76 = scmp.eq.s32.totalorder %s17, 1
    %p77 = por %p75, %p76
    %p78 = scmp.ne.s32.totalorder %s69, %s70
    %p79 = scmp.eq.s32.totalorder %s17, 0
    %p80 = por %p78, %p79
    %p81 = scmp.ne.s32.totalorder %s69, %s70
    %p82 = scmp.eq.s32.totalorder %s18, 1
    %p83 = por %p81, %p82
    %p85 = scmp.ne.s32.totalorder %s70, %s84
    %p86 = scmp.eq.s32.totalorder %s18, 0
    %p87 = por %p85, %p86
    %s89 = sadd.s32 %s88, 1
    %p92 = scmp.eq.s32.totalorder %s12, 1
    %p93 = scmp.ne.s32.totalorder %s88, %s90
    %p94 = scmp.eq.s32.totalorder %s12, 0
    %p95 = por %p93, %p94
    %p96 = scmp.ne.s32.totalorder %s88, %s90
    %p97 = scmp.eq.s32.totalorder %s17, 1
    %p98 = por %p96, %p97
    %p99 = scmp.ne.s32.totalorder %s90, %s91
    %p100 = scmp.eq.s32.totalorder %s17, 0
    %p101 = por %p99, %p100
    %p102 = scmp.ne.s32.totalorder %s90, %s91
    %p103 = scmp.eq.s32.totalorder %s18, 1
    %p104 = por %p102, %p103
    %p106 = scmp.ne.s32.totalorder %s91, %s105
    %p107 = scmp.eq.s32.totalorder %s18, 0
    %p108 = por %p106, %p107
    %s110 = sadd.s32 %s109, 1
    %p113 = scmp.eq.s32.totalorder %s12, 1
    %p114 = scmp.ne.s32.totalorder %s109, %s111
    %p115 = scmp.eq.s32.totalorder %s12, 0
    %p116 = por %p114, %p115
    %p117 = scmp.ne.s32.totalorder %s109, %s111
    %p118 = scmp.eq.s32.totalorder %s17, 1
    %p119 = por %p117, %p118
    %p120 = scmp.ne.s32.totalorder %s111, %s112
    %p121 = scmp.eq.s32.totalorder %s17, 0
    %p122 = por %p120, %p121
    %p123 = scmp.ne.s32.totalorder %s111, %s112
    %p124 = scmp.eq.s32.totalorder %s18, 1
    %p125 = por %p123, %p124
    %p127 = scmp.ne.s32.totalorder %s112, %s126
    %p128 = scmp.eq.s32.totalorder %s18, 0
    %p129 = por %p127, %p128
    %s131 = sadd.s32 %s130, 1
    %p134 = scmp.eq.s32.totalorder %s12, 1
    %p135 = scmp.ne.s32.totalorder %s130, %s132
    %p136 = scmp.eq.s32.totalorder %s12, 0
    %p137 = por %p135, %p136
    %p138 = scmp.ne.s32.totalorder %s130, %s132
    %p139 = scmp.eq.s32.totalorder %s17, 1
    %p140 = por %p138, %p139
    %p141 = scmp.ne.s32.totalorder %s132, %s133
    %p142 = scmp.eq.s32.totalorder %s17, 0
    %p143 = por %p141, %p142
    %p144 = scmp.ne.s32.totalorder %s132, %s133
    %p145 = scmp.eq.s32.totalorder %s18, 1
    %p146 = por %p144, %p145
    %p148 = scmp.ne.s32.totalorder %s133, %s147
    %p149 = scmp.eq.s32.totalorder %s18, 0
    %p150 = por %p148, %p149
    %s151 = ssub.s32 %s12, %s19
    %p152 = scmp.eq.s32.totalorder %s151, 0
    %s154 = sadd.s32 %s153, 1
    %s155 = scalar_select %p152, %s153, %s154
    %p158 = pneg %p152
    %p159 = scmp.eq.s32.totalorder %s12, 1
    %p160 = por %p158, %p159
    %p161 = scmp.ne.s32.totalorder %s153, %s156
    %p162 = scmp.eq.s32.totalorder %s12, 0
    %p163 = por %p161, %p162
    %p164 = scmp.ne.s32.totalorder %s153, %s156
    %p165 = scmp.eq.s32.totalorder %s17, 1
    %p166 = por %p164, %p165
    %p167 = scmp.ne.s32.totalorder %s156, %s157
    %p168 = scmp.eq.s32.totalorder %s17, 0
    %p169 = por %p167, %p168
    %p170 = scmp.ne.s32.totalorder %s156, %s157
    %p171 = scmp.eq.s32.totalorder %s18, 1
    %p172 = por %p170, %p171
    %p174 = scmp.ne.s32.totalorder %s157, %s173
    %p175 = scmp.eq.s32.totalorder %s18, 0
    %p176 = por %p174, %p175
    %p177 = scmp.le.s32.totalorder 1, %s12
    %p178 = scmp.lt.s32.totalorder %s12, 3
    %p179 = pnand %p177, %p178
    %p180 = pneg %p179
    // Predicated region
    $region9: #{tcn_gcn_unit.1} parent=5 // pred_check
      _
    $region10: #{tcn_gcn_unit.1} parent=5 // pred_check_branch
      %182 = sbr.rel (%p179) target = $region12
    $region11: #{tcn_gcn_unit.1} parent=5 // pred_region
      %s183 = ssub.s32 %s12, 1
      // Predicated region
      $region13: #{tcn_gcn_unit.1} parent=11 // pred_check
        %p184 = pneg %p59
      $region14: #{tcn_gcn_unit.1} parent=11 // pred_check_branch
        %186 = sbr.rel (%p184) target = $region16
      $region15: #{tcn_gcn_unit.1} parent=11 // pred_region
        _
      $region16: #{tcn_gcn_unit.1} parent=11 // pred_fallthru
        _
      // Predicated region
      $region17: #{tcn_gcn_unit.1} parent=11 // pred_check
        %p187 = pneg %p80
      $region18: #{tcn_gcn_unit.1} parent=11 // pred_check_branch
        %189 = sbr.rel (%p187) target = $region20
      $region19: #{tcn_gcn_unit.1} parent=11 // pred_region
        _
      $region20: #{tcn_gcn_unit.1} parent=11 // pred_fallthru
        _
      // Predicated region
      $region21: #{tcn_gcn_unit.1} parent=11 // pred_check
        %p190 = pneg %p101
      $region22: #{tcn_gcn_unit.1} parent=11 // pred_check_branch
        %192 = sbr.rel (%p190) target = $region24
      $region23: #{tcn_gcn_unit.1} parent=11 // pred_region
        _
      $region24: #{tcn_gcn_unit.1} parent=11 // pred_fallthru
        _
      // Predicated region
      $region25: #{tcn_gcn_unit.1} parent=11 // pred_check
        %p193 = pneg %p122
      $region26: #{tcn_gcn_unit.1} parent=11 // pred_check_branch
        %195 = sbr.rel (%p193) target = $region28
      $region27: #{tcn_gcn_unit.1} parent=11 // pred_region
        _
      $region28: #{tcn_gcn_unit.1} parent=11 // pred_fallthru
        _
      // Predicated region
      $region29: #{tcn_gcn_unit.1} parent=11 // pred_check
        %p196 = pneg %p143
      $region30: #{tcn_gcn_unit.1} parent=11 // pred_check_branch
        %198 = sbr.rel (%p196) target = $region32
      $region31: #{tcn_gcn_unit.1} parent=11 // pred_region
        _
      $region32: #{tcn_gcn_unit.1} parent=11 // pred_fallthru
        _
    $region12: #{tcn_gcn_unit.1} parent=5 // pred_fallthru
      _
    %p199 = scmp.lt.s32.totalorder %s12, 2
    // Predicated region
    $region33: #{tcn_gcn_unit.1} parent=5 // pred_check
      %p200 = pneg %p199
    $region34: #{tcn_gcn_unit.1} parent=5 // pred_check_branch
      %202 = sbr.rel (%p200) target = $region36
    $region35: #{tcn_gcn_unit.1} parent=5 // pred_region
      // Predicated region
      $region37: #{tcn_gcn_unit.1} parent=35 // pred_check
        %p203 = pneg %p32
      $region38: #{tcn_gcn_unit.1} parent=35 // pred_check_branch
        %205 = sbr.rel (%p203) target = $region40
      $region39: #{tcn_gcn_unit.1} parent=35 // pred_region
        %p206 = scmp.lt.s32.totalorder %s12, 1
        %s207 = scalar_select %p206, %s12, 1
        %s208 = smul.addr %s207, 2
        %s209 = smul.addr %s208, 2
        %s210 = scalar_lea.vmem %s0, %s209
      $region40: #{tcn_gcn_unit.1} parent=35 // pred_fallthru
        _
    $region36: #{tcn_gcn_unit.1} parent=5 // pred_fallthru
      _
    %p211 = scmp.le.s32.totalorder 1, %s12
    %p212 = scmp.lt.s32.totalorder %s12, 3
    %p213 = pnand %p211, %p212
    %p214 = pneg %p213
    // Predicated region
    $region41: #{tcn_gcn_unit.1} parent=5 // pred_check
      _
    $region42: #{tcn_gcn_unit.1} parent=5 // pred_check_branch
      %216 = sbr.rel (%p213) target = $region44
    $region43: #{tcn_gcn_unit.1} parent=5 // pred_region
      %s217 = ssub.s32 %s12, 1
      %p218 = scmp.lt.s32.totalorder %s17, 1
      %s219 = scalar_select %p218, %s17, 1
      %s220 = smul.addr %s219, 2
      %s221 = smul.addr %s220, 2
      %s222 = scalar_lea.vmem %s0, %s221
      %p223 = pneg %p38
      %p224 = pneg %p35
      %p225 = pneg %p59
      %p226 = pneg %p56
      %p227 = pneg %p80
      %p228 = pneg %p77
      %p229 = pneg %p101
      %p230 = pneg %p98
      %p231 = pneg %p122
      %p232 = pneg %p119
      %p233 = pneg %p143
      %p234 = pneg %p140
      %p235 = pneg %p169
      %p236 = pneg %p166
      %p237 = scmp.lt.s32.totalorder %s17, 1
      %s238 = scalar_select %p237, %s17, 1
      %s239 = smul.addr %s238, 2
      %s240 = smul.addr %s239, 8
      %s241 = scalar_lea.vmem %s6, %s240
      %p242 = scmp.lt.s32.totalorder %s17, 1
      %s243 = scalar_select %p242, %s17, 1
      %s244 = smul.addr %s243, 2
      %s245 = smul.addr %s244, 2
      %s246 = scalar_lea.vmem %s0, %s245
      %p247 = scmp.lt.s32.totalorder %s17, 1
      %s248 = scalar_select %p247, %s17, 1
      %s249 = smul.addr %s248, 2
      %s250 = smul.addr %s249, 8
      %s251 = scalar_lea.vmem %s6, %s250
      %v253 = vld [vmem:[%s246] sm:$0xf]
      %v254 = vld [vmem:[%s1] sm:$0xff]
      %v255 = vld [vmem:[%s1 + $0x8] sm:$0xff]
      %v256 = vld [vmem:[%s1 + $0x10] sm:$0xff]
      %v257 = vld [vmem:[%s1 + $0x18] sm:$0xff]
      %v258 = vld [vmem:[%s1 + $0x20] sm:$0xff]
      %v259 = vld [vmem:[%s1 + $0x28] sm:$0xff]
      %v260 = vld [vmem:[%s1 + $0x30] sm:$0xff]
      %v261 = vld [vmem:[%s1 + $0x38] sm:$0xff]
      %v262 = vld [vmem:[%s1 + $0x40] sm:$0xff]
      %v263 = vld [vmem:[%s1 + $0x48] sm:$0xff]
      %v264 = vld [vmem:[%s1 + $0x50] sm:$0xff]
      %v265 = vld [vmem:[%s1 + $0x58] sm:$0xff]
      %v266 = vld [vmem:[%s1 + $0x60] sm:$0xff]
      %v267 = vld [vmem:[%s1 + $0x68] sm:$0xff]
      %v268 = vld [vmem:[%s1 + $0x70] sm:$0xff]
      %v269 = vld [vmem:[%s1 + $0x78] sm:$0xff]
      %v270 = vld [vmem:[%s1 + $0x80] sm:$0xff]
      %v271 = vld [vmem:[%s1 + $0x88] sm:$0xff]
      %v272 = vld [vmem:[%s1 + $0x90] sm:$0xff]
      %v273 = vld [vmem:[%s1 + $0x98] sm:$0xff]
      %v274 = vld [vmem:[%s1 + $0xa0] sm:$0xff]
      %v275 = vld [vmem:[%s1 + $0xa8] sm:$0xff]
      %v276 = vld [vmem:[%s1 + $0xb0] sm:$0xff]
      %v277 = vld [vmem:[%s1 + $0xb8] sm:$0xff]
      %v278 = vld [vmem:[%s1 + $0xc0] sm:$0xff]
      %v279 = vld [vmem:[%s1 + $0xc8] sm:$0xff]
      %v280 = vld [vmem:[%s1 + $0xd0] sm:$0xff]
      %v281 = vld [vmem:[%s1 + $0xd8] sm:$0xff]
      %v282 = vld [vmem:[%s1 + $0xe0] sm:$0xff]
      %v283 = vld [vmem:[%s1 + $0xe8] sm:$0xff]
      %v284 = vld [vmem:[%s1 + $0xf0] sm:$0xff]
      %v285 = vld [vmem:[%s1 + $0xf8] sm:$0xff]
      %v288 = vunpack.c.l.s4 1983009808
      %v289 = vunpack.c.0.s8 %v288
      %v290 = vlaneseq
      %v291 = vshrl.u32 %v290, 7
      %v292 = vsub.s32 %v289, %v291
      %v293 = vrot.slane %v253, %v292
      %v294 = vcombine.high %v293, %v293
      %v329 = vunpack.c.l.b16 %v254
      %v330 = vunpack.c.h.b16 %v254
      %v331 = vunpack.c.l.b16 %v255
      %v332 = vunpack.c.h.b16 %v255
      %v333 = vunpack.c.l.b16 %v256
      %v334 = vunpack.c.h.b16 %v256
      %v335 = vunpack.c.l.b16 %v257
      %v336 = vunpack.c.h.b16 %v257
      %v337 = vunpack.c.l.b16 %v258
      %v338 = vunpack.c.h.b16 %v258
      %v339 = vunpack.c.l.b16 %v259
      %v340 = vunpack.c.h.b16 %v259
      %v341 = vunpack.c.l.b16 %v260
      %v342 = vunpack.c.h.b16 %v260
      %v343 = vunpack.c.l.b16 %v261
      %v344 = vunpack.c.h.b16 %v261
      %v345 = vunpack.c.l.b16 %v262
      %v346 = vunpack.c.h.b16 %v262
      %v347 = vunpack.c.l.b16 %v263
      %v348 = vunpack.c.h.b16 %v263
      %v349 = vunpack.c.l.b16 %v264
      %v350 = vunpack.c.h.b16 %v264
      %v351 = vunpack.c.l.b16 %v265
      %v352 = vunpack.c.h.b16 %v265
      %v353 = vunpack.c.l.b16 %v266
      %v354 = vunpack.c.h.b16 %v266
      %v355 = vunpack.c.l.b16 %v267
      %v356 = vunpack.c.h.b16 %v267
      %v357 = vunpack.c.l.b16 %v268
      %v358 = vunpack.c.h.b16 %v268
      %v359 = vunpack.c.l.b16 %v269
      %v360 = vunpack.c.h.b16 %v269
      %v361 = vunpack.c.l.b16 %v270
      %v362 = vunpack.c.h.b16 %v270
      %v363 = vunpack.c.l.b16 %v271
      %v364 = vunpack.c.h.b16 %v271
      %v365 = vunpack.c.l.b16 %v272
      %v366 = vunpack.c.h.b16 %v272
      %v367 = vunpack.c.l.b16 %v273
      %v368 = vunpack.c.h.b16 %v273
      %v369 = vunpack.c.l.b16 %v274
      %v370 = vunpack.c.h.b16 %v274
      %v371 = vunpack.c.l.b16 %v275
      %v372 = vunpack.c.h.b16 %v275
      %v373 = vunpack.c.l.b16 %v276
      %v374 = vunpack.c.h.b16 %v276
      %v375 = vunpack.c.l.b16 %v277
      %v376 = vunpack.c.h.b16 %v277
      %v377 = vunpack.c.l.b16 %v278
      %v378 = vunpack.c.h.b16 %v278
      %v379 = vunpack.c.l.b16 %v279
      %v380 = vunpack.c.h.b16 %v279
      %v381 = vunpack.c.l.b16 %v280
      %v382 = vunpack.c.h.b16 %v280
      %v383 = vunpack.c.l.b16 %v281
      %v384 = vunpack.c.h.b16 %v281
      %v385 = vunpack.c.l.b16 %v282
      %v386 = vunpack.c.h.b16 %v282
      %v387 = vunpack.c.l.b16 %v283
      %v388 = vunpack.c.h.b16 %v283
      %v389 = vunpack.c.l.b16 %v284
      %v390 = vunpack.c.h.b16 %v284
      %v391 = vunpack.c.l.b16 %v285
      %v392 = vunpack.c.h.b16 %v285
      %v393 = vpack.c.b16 %v331, %v329
      %v394 = vpack.c.b16 %v332, %v330
      %v395 = vpack.c.b16 %v335, %v333
      %v396 = vpack.c.b16 %v336, %v334
      %v397 = vpack.c.b16 %v339, %v337
      %v398 = vpack.c.b16 %v340, %v338
      %v399 = vpack.c.b16 %v343, %v341
      %v400 = vpack.c.b16 %v344, %v342
      %v401 = vpack.c.b16 %v347, %v345
      %v402 = vpack.c.b16 %v348, %v346
      %v403 = vpack.c.b16 %v351, %v349
      %v404 = vpack.c.b16 %v352, %v350
      %v405 = vpack.c.b16 %v355, %v353
      %v406 = vpack.c.b16 %v356, %v354
      %v407 = vpack.c.b16 %v359, %v357
      %v408 = vpack.c.b16 %v360, %v358
      %v409 = vpack.c.b16 %v363, %v361
      %v410 = vpack.c.b16 %v364, %v362
      %v411 = vpack.c.b16 %v367, %v365
      %v412 = vpack.c.b16 %v368, %v366
      %v413 = vpack.c.b16 %v371, %v369
      %v414 = vpack.c.b16 %v372, %v370
      %v415 = vpack.c.b16 %v375, %v373
      %v416 = vpack.c.b16 %v376, %v374
      %v417 = vpack.c.b16 %v379, %v377
      %v418 = vpack.c.b16 %v380, %v378
      %v419 = vpack.c.b16 %v383, %v381
      %v420 = vpack.c.b16 %v384, %v382
      %v421 = vpack.c.b16 %v387, %v385
      %v422 = vpack.c.b16 %v388, %v386
      %v423 = vpack.c.b16 %v391, %v389
      %v424 = vpack.c.b16 %v392, %v390
      %457 = vmatprep.subr.bf16.mxu0 %v408
      %458 = vmatpush1.bf16.msra.mxu0 %v407
      %459 = vmatprep.subr.bf16.mxu0 %v406
      %460 = vmatpush1.bf16.msra.mxu0 %v405
      %461 = vmatprep.subr.bf16.mxu0 %v404
      %462 = vmatpush1.bf16.msra.mxu0 %v403
      %463 = vmatprep.subr.bf16.mxu0 %v402
      %464 = vmatpush1.bf16.msra.mxu0 %v401
      %465 = vmatprep.subr.bf16.mxu0 %v400
      %466 = vmatpush1.bf16.msra.mxu0 %v399
      %467 = vmatprep.subr.bf16.mxu0 %v398
      %468 = vmatpush1.bf16.msra.mxu0 %v397
      %469 = vmatprep.subr.bf16.mxu0 %v396
      %470 = vmatpush1.bf16.msra.mxu0 %v395
      %471 = vmatprep.subr.bf16.mxu0 %v394
      %472 = vmatpush1.bf16.msra.mxu0 %v393
      %473 = vmatprep.subr.bf16.mxu0 %v424
      %474 = vmatpush2.bf16.msra.mxu0 %v423
      %475 = vmatprep.subr.bf16.mxu0 %v422
      %476 = vmatpush2.bf16.msra.mxu0 %v421
      %477 = vmatprep.subr.bf16.mxu0 %v420
      %478 = vmatpush2.bf16.msra.mxu0 %v419
      %479 = vmatprep.subr.bf16.mxu0 %v418
      %480 = vmatpush2.bf16.msra.mxu0 %v417
      %481 = vmatprep.subr.bf16.mxu0 %v416
      %482 = vmatpush2.bf16.msra.mxu0 %v415
      %483 = vmatprep.subr.bf16.mxu0 %v414
      %484 = vmatpush2.bf16.msra.mxu0 %v413
      %485 = vmatprep.subr.bf16.mxu0 %v412
      %486 = vmatpush2.bf16.msra.mxu0 %v411
      %487 = vmatprep.subr.bf16.mxu0 %v410
      %488 = vmatpush2.bf16.msra.mxu0 %v409
      %489 = vmatprep.mubr.bf16.mxu0 %v294
      %490 = vmatmul.mubr.bf16.gmra.mxu0 %v293
      %v491 = vpop.f32.mrf.mxu0
      %v492 = vadd.f32 0.0, %v491
      %v493 = vpop.f32.mrf.mxu0
      %v494 = vadd.f32 0.0, %v493
      %v495 = vpop.f32.mrf.mxu0
      %v496 = vpop.f32.mrf.mxu0
      %497 = vdwg.mxu0
      %v498 = vld [vmem:[%s2] sm:$0xf]
      %v499 = vpack.c.bf16 %v492, %v492
      %v500 = vpack.c.bf16 %v494, %v494
      %s501 = scalar_lea.vmem %s1, 256
      %v502 = vld [vmem:[%s501] sm:$0xff]
      %v503 = vld [vmem:[%s501 + $0x8] sm:$0xff]
      %v504 = vld [vmem:[%s501 + $0x10] sm:$0xff]
      %v505 = vld [vmem:[%s501 + $0x18] sm:$0xff]
      %v506 = vld [vmem:[%s501 + $0x20] sm:$0xff]
      %v507 = vld [vmem:[%s501 + $0x28] sm:$0xff]
      %v508 = vld [vmem:[%s501 + $0x30] sm:$0xff]
      %v509 = vld [vmem:[%s501 + $0x38] sm:$0xff]
      %v510 = vld [vmem:[%s501 + $0x40] sm:$0xff]
      %v511 = vld [vmem:[%s501 + $0x48] sm:$0xff]
      %v512 = vld [vmem:[%s501 + $0x50] sm:$0xff]
      %v513 = vld [vmem:[%s501 + $0x58] sm:$0xff]
      %v514 = vld [vmem:[%s501 + $0x60] sm:$0xff]
      %v515 = vld [vmem:[%s501 + $0x68] sm:$0xff]
      %v516 = vld [vmem:[%s501 + $0x70] sm:$0xff]
      %v517 = vld [vmem:[%s501 + $0x78] sm:$0xff]
      %v518 = vld [vmem:[%s501 + $0x80] sm:$0xff]
      %v519 = vld [vmem:[%s501 + $0x88] sm:$0xff]
      %v520 = vld [vmem:[%s501 + $0x90] sm:$0xff]
      %v521 = vld [vmem:[%s501 + $0x98] sm:$0xff]
      %v522 = vld [vmem:[%s501 + $0xa0] sm:$0xff]
      %v523 = vld [vmem:[%s501 + $0xa8] sm:$0xff]
      %v524 = vld [vmem:[%s501 + $0xb0] sm:$0xff]
      %v525 = vld [vmem:[%s501 + $0xb8] sm:$0xff]
      %v526 = vld [vmem:[%s501 + $0xc0] sm:$0xff]
      %v527 = vld [vmem:[%s501 + $0xc8] sm:$0xff]
      %v528 = vld [vmem:[%s501 + $0xd0] sm:$0xff]
      %v529 = vld [vmem:[%s501 + $0xd8] sm:$0xff]
      %v530 = vld [vmem:[%s501 + $0xe0] sm:$0xff]
      %v531 = vld [vmem:[%s501 + $0xe8] sm:$0xff]
      %v532 = vld [vmem:[%s501 + $0xf0] sm:$0xff]
      %v533 = vld [vmem:[%s501 + $0xf8] sm:$0xff]
      %v566 = vunpack.c.l.b16 %v502
      %v567 = vunpack.c.h.b16 %v502
      %v568 = vunpack.c.l.b16 %v503
      %v569 = vunpack.c.h.b16 %v503
      %v570 = vunpack.c.l.b16 %v504
      %v571 = vunpack.c.h.b16 %v504
      %v572 = vunpack.c.l.b16 %v505
      %v573 = vunpack.c.h.b16 %v505
      %v574 = vunpack.c.l.b16 %v506
      %v575 = vunpack.c.h.b16 %v506
      %v576 = vunpack.c.l.b16 %v507
      %v577 = vunpack.c.h.b16 %v507
      %v578 = vunpack.c.l.b16 %v508
      %v579 = vunpack.c.h.b16 %v508
      %v580 = vunpack.c.l.b16 %v509
      %v581 = vunpack.c.h.b16 %v509
      %v582 = vunpack.c.l.b16 %v510
      %v583 = vunpack.c.h.b16 %v510
      %v584 = vunpack.c.l.b16 %v511
      %v585 = vunpack.c.h.b16 %v511
      %v586 = vunpack.c.l.b16 %v512
      %v587 = vunpack.c.h.b16 %v512
      %v588 = vunpack.c.l.b16 %v513
      %v589 = vunpack.c.h.b16 %v513
      %v590 = vunpack.c.l.b16 %v514
      %v591 = vunpack.c.h.b16 %v514
      %v592 = vunpack.c.l.b16 %v515
      %v593 = vunpack.c.h.b16 %v515
      %v594 = vunpack.c.l.b16 %v516
      %v595 = vunpack.c.h.b16 %v516
      %v596 = vunpack.c.l.b16 %v517
      %v597 = vunpack.c.h.b16 %v517
      %v598 = vunpack.c.l.b16 %v518
      %v599 = vunpack.c.h.b16 %v518
      %v600 = vunpack.c.l.b16 %v519
      %v601 = vunpack.c.h.b16 %v519
      %v602 = vunpack.c.l.b16 %v520
      %v603 = vunpack.c.h.b16 %v520
      %v604 = vunpack.c.l.b16 %v521
      %v605 = vunpack.c.h.b16 %v521
      %v606 = vunpack.c.l.b16 %v522
      %v607 = vunpack.c.h.b16 %v522
      %v608 = vunpack.c.l.b16 %v523
      %v609 = vunpack.c.h.b16 %v523
      %v610 = vunpack.c.l.b16 %v524
      %v611 = vunpack.c.h.b16 %v524
      %v612 = vunpack.c.l.b16 %v525
      %v613 = vunpack.c.h.b16 %v525
      %v614 = vunpack.c.l.b16 %v526
      %v615 = vunpack.c.h.b16 %v526
      %v616 = vunpack.c.l.b16 %v527
      %v617 = vunpack.c.h.b16 %v527
      %v618 = vunpack.c.l.b16 %v528
      %v619 = vunpack.c.h.b16 %v528
      %v620 = vunpack.c.l.b16 %v529
      %v621 = vunpack.c.h.b16 %v529
      %v622 = vunpack.c.l.b16 %v530
      %v623 = vunpack.c.h.b16 %v530
      %v624 = vunpack.c.l.b16 %v531
      %v625 = vunpack.c.h.b16 %v531
      %v626 = vunpack.c.l.b16 %v532
      %v627 = vunpack.c.h.b16 %v532
      %v628 = vunpack.c.l.b16 %v533
      %v629 = vunpack.c.h.b16 %v533
      %v630 = vpack.c.b16 %v568, %v566
      %v631 = vpack.c.b16 %v569, %v567
      %v632 = vpack.c.b16 %v572, %v570
      %v633 = vpack.c.b16 %v573, %v571
      %v634 = vpack.c.b16 %v576, %v574
      %v635 = vpack.c.b16 %v577, %v575
      %v636 = vpack.c.b16 %v580, %v578
      %v637 = vpack.c.b16 %v581, %v579
      %v638 = vpack.c.b16 %v584, %v582
      %v639 = vpack.c.b16 %v585, %v583
      %v640 = vpack.c.b16 %v588, %v586
      %v641 = vpack.c.b16 %v589, %v587
      %v642 = vpack.c.b16 %v592, %v590
      %v643 = vpack.c.b16 %v593, %v591
      %v644 = vpack.c.b16 %v596, %v594
      %v645 = vpack.c.b16 %v597, %v595
      %v646 = vpack.c.b16 %v600, %v598
      %v647 = vpack.c.b16 %v601, %v599
      %v648 = vpack.c.b16 %v604, %v602
      %v649 = vpack.c.b16 %v605, %v603
      %v650 = vpack.c.b16 %v608, %v606
      %v651 = vpack.c.b16 %v609, %v607
      %v652 = vpack.c.b16 %v612, %v610
      %v653 = vpack.c.b16 %v613, %v611
      %v654 = vpack.c.b16 %v616, %v614
      %v655 = vpack.c.b16 %v617, %v615
      %v656 = vpack.c.b16 %v620, %v618
      %v657 = vpack.c.b16 %v621, %v619
      %v658 = vpack.c.b16 %v624, %v622
      %v659 = vpack.c.b16 %v625, %v623
      %v660 = vpack.c.b16 %v628, %v626
      %v661 = vpack.c.b16 %v629, %v627
      %694 = vmatprep.subr.bf16.mxu0 %v645
      %695 = vmatpush1.bf16.msra.mxu0 %v644
      %696 = vmatprep.subr.bf16.mxu0 %v643
      %697 = vmatpush1.bf16.msra.mxu0 %v642
      %698 = vmatprep.subr.bf16.mxu0 %v641
      %699 = vmatpush1.bf16.msra.mxu0 %v640
      %700 = vmatprep.subr.bf16.mxu0 %v639
      %701 = vmatpush1.bf16.msra.mxu0 %v638
      %702 = vmatprep.subr.bf16.mxu0 %v637
      %703 = vmatpush1.bf16.msra.mxu0 %v636
      %704 = vmatprep.subr.bf16.mxu0 %v635
      %705 = vmatpush1.bf16.msra.mxu0 %v634
      %706 = vmatprep.subr.bf16.mxu0 %v633
      %707 = vmatpush1.bf16.msra.mxu0 %v632
      %708 = vmatprep.subr.bf16.mxu0 %v631
      %709 = vmatpush1.bf16.msra.mxu0 %v630
      %710 = vmatprep.subr.bf16.mxu0 %v661
      %711 = vmatpush2.bf16.msra.mxu0 %v660
      %712 = vmatprep.subr.bf16.mxu0 %v659
      %713 = vmatpush2.bf16.msra.mxu0 %v658
      %714 = vmatprep.subr.bf16.mxu0 %v657
      %715 = vmatpush2.bf16.msra.mxu0 %v656
      %716 = vmatprep.subr.bf16.mxu0 %v655
      %717 = vmatpush2.bf16.msra.mxu0 %v654
      %718 = vmatprep.subr.bf16.mxu0 %v653
      %719 = vmatpush2.bf16.msra.mxu0 %v652
      %720 = vmatprep.subr.bf16.mxu0 %v651
      %721 = vmatpush2.bf16.msra.mxu0 %v650
      %722 = vmatprep.subr.bf16.mxu0 %v649
      %723 = vmatpush2.bf16.msra.mxu0 %v648
      %724 = vmatprep.subr.bf16.mxu0 %v647
      %725 = vmatpush2.bf16.msra.mxu0 %v646
      %726 = vmatprep.mubr.bf16.mxu0 %v294
      %727 = vmatmul.mubr.bf16.gmra.mxu0 %v293
      %v728 = vpop.f32.mrf.mxu0
      %v729 = vadd.f32 0.0, %v728
      %v730 = vpop.f32.mrf.mxu0
      %v731 = vadd.f32 0.0, %v730
      %v732 = vpop.f32.mrf.mxu0
      %v733 = vpop.f32.mrf.mxu0
      %734 = vdwg.mxu0
      %s735 = scalar_lea.vmem %s2, 4
      %v736 = vld [vmem:[%s735] sm:$0xf]
      %v737 = vpack.c.bf16 %v729, %v729
      %v738 = vpack.c.bf16 %v731, %v731
      %vm739 = vcmask 31744
      %v741 = vsel %vm739, %v736, 0
      %vm743 = vcmask 1041408
      %v745 = vsel %vm743, %v737, 0
      %v748 = vsel %vm743, %v738, 0
      %750 = vmatprep.subr.bf16.mxu0 0
      %751 = vmatpush1.bf16.msra.mxu0 0
      %752 = vmatprep.subr.bf16.mxu0 0
      %753 = vmatpush1.bf16.msra.mxu0 0
      %754 = vmatprep.subr.bf16.mxu0 0
      %755 = vmatpush1.bf16.msra.mxu0 0
      %756 = vmatprep.subr.bf16.mxu0 0
      %757 = vmatpush1.bf16.msra.mxu0 0
      %758 = vmatprep.subr.bf16.mxu0 0
      %759 = vmatpush1.bf16.msra.mxu0 0
      %760 = vmatprep.subr.bf16.mxu0 0
      %761 = vmatpush1.bf16.msra.mxu0 0
      %762 = vmatprep.subr.bf16.mxu0 0
      %763 = vmatpush1.bf16.msra.mxu0 0
      %764 = vmatprep.subr.bf16.mxu0 %v748
      %765 = vmatpush1.bf16.msra.mxu0 %v745
      %766 = vmatprep.subr.bf16.mxu0 0
      %767 = vmatpush2.bf16.msra.mxu0 0
      %768 = vmatprep.subr.bf16.mxu0 0
      %769 = vmatpush2.bf16.msra.mxu0 0
      %770 = vmatprep.subr.bf16.mxu0 0
      %771 = vmatpush2.bf16.msra.mxu0 0
      %772 = vmatprep.subr.bf16.mxu0 0
      %773 = vmatpush2.bf16.msra.mxu0 0
      %774 = vmatprep.subr.bf16.mxu0 0
      %775 = vmatpush2.bf16.msra.mxu0 0
      %776 = vmatprep.subr.bf16.mxu0 0
      %777 = vmatpush2.bf16.msra.mxu0 0
      %778 = vmatprep.subr.bf16.mxu0 0
      %779 = vmatpush2.bf16.msra.mxu0 0
      %780 = vmatprep.subr.bf16.mxu0 0
      %781 = vmatpush2.bf16.msra.mxu0 0
      %782 = vmatprep.mubr.bf16.mxu0 0
      %783 = vmatmul.mubr.bf16.gmra.mxu0 %v741
      %v784 = vpop.f32.mrf.mxu0
      %v785 = vadd.f32 0.0, %v784
      %v786 = vpop.f32.mrf.mxu0
      %v787 = vadd.f32 0.0, %v786
      %v788 = vpop.f32.mrf.mxu0
      %v789 = vpop.f32.mrf.mxu0
      %790 = vdwg.mxu0
      %v792 = vsel %vm739, %v498, 0
      %v795 = vsel %vm743, %v499, 0
      %v798 = vsel %vm743, %v500, 0
      %800 = vmatprep.subr.bf16.mxu0 0
      %801 = vmatpush1.bf16.msra.mxu0 0
      %802 = vmatprep.subr.bf16.mxu0 0
      %803 = vmatpush1.bf16.msra.mxu0 0
      %804 = vmatprep.subr.bf16.mxu0 0
      %805 = vmatpush1.bf16.msra.mxu0 0
      %806 = vmatprep.subr.bf16.mxu0 0
      %807 = vmatpush1.bf16.msra.mxu0 0
      %808 = vmatprep.subr.bf16.mxu0 0
      %809 = vmatpush1.bf16.msra.mxu0 0
      %810 = vmatprep.subr.bf16.mxu0 0
      %811 = vmatpush1.bf16.msra.mxu0 0
      %812 = vmatprep.subr.bf16.mxu0 0
      %813 = vmatpush1.bf16.msra.mxu0 0
      %814 = vmatprep.subr.bf16.mxu0 %v798
      %815 = vmatpush1.bf16.msra.mxu0 %v795
      %816 = vmatprep.subr.bf16.mxu0 0
      %817 = vmatpush2.bf16.msra.mxu0 0
      %818 = vmatprep.subr.bf16.mxu0 0
      %819 = vmatpush2.bf16.msra.mxu0 0
      %820 = vmatprep.subr.bf16.mxu0 0
      %821 = vmatpush2.bf16.msra.mxu0 0
      %822 = vmatprep.subr.bf16.mxu0 0
      %823 = vmatpush2.bf16.msra.mxu0 0
      %824 = vmatprep.subr.bf16.mxu0 0
      %825 = vmatpush2.bf16.msra.mxu0 0
      %826 = vmatprep.subr.bf16.mxu0 0
      %827 = vmatpush2.bf16.msra.mxu0 0
      %828 = vmatprep.subr.bf16.mxu0 0
      %829 = vmatpush2.bf16.msra.mxu0 0
      %830 = vmatprep.subr.bf16.mxu0 0
      %831 = vmatpush2.bf16.msra.mxu0 0
      %832 = vmatprep.mubr.bf16.mxu0 0
      %833 = vmatmul.mubr.bf16.gmra.mxu0 %v792
      %v834 = vpop.f32.mrf.mxu0
      %v835 = vadd.f32 %v785, %v834
      %v836 = vpop.f32.mrf.mxu0
      %v837 = vadd.f32 %v787, %v836
      %v838 = vpop.f32.mrf.mxu0
      %v839 = vpop.f32.mrf.mxu0
      %840 = vdwg.mxu0
      %s841 = scalar_lea.vmem %s1, 512
      %v842 = vld [vmem:[%s841] sm:$0xff]
      %v843 = vld [vmem:[%s841 + $0x8] sm:$0xff]
      %v844 = vld [vmem:[%s841 + $0x10] sm:$0xff]
      %v845 = vld [vmem:[%s841 + $0x18] sm:$0xff]
      %v846 = vld [vmem:[%s841 + $0x20] sm:$0xff]
      %v847 = vld [vmem:[%s841 + $0x28] sm:$0xff]
      %v848 = vld [vmem:[%s841 + $0x30] sm:$0xff]
      %v849 = vld [vmem:[%s841 + $0x38] sm:$0xff]
      %v850 = vld [vmem:[%s841 + $0x40] sm:$0xff]
      %v851 = vld [vmem:[%s841 + $0x48] sm:$0xff]
      %v852 = vld [vmem:[%s841 + $0x50] sm:$0xff]
      %v853 = vld [vmem:[%s841 + $0x58] sm:$0xff]
      %v854 = vld [vmem:[%s841 + $0x60] sm:$0xff]
      %v855 = vld [vmem:[%s841 + $0x68] sm:$0xff]
      %v856 = vld [vmem:[%s841 + $0x70] sm:$0xff]
      %v857 = vld [vmem:[%s841 + $0x78] sm:$0xff]
      %v858 = vld [vmem:[%s841 + $0x80] sm:$0xff]
      %v859 = vld [vmem:[%s841 + $0x88] sm:$0xff]
      %v860 = vld [vmem:[%s841 + $0x90] sm:$0xff]
      %v861 = vld [vmem:[%s841 + $0x98] sm:$0xff]
      %v862 = vld [vmem:[%s841 + $0xa0] sm:$0xff]
      %v863 = vld [vmem:[%s841 + $0xa8] sm:$0xff]
      %v864 = vld [vmem:[%s841 + $0xb0] sm:$0xff]
      %v865 = vld [vmem:[%s841 + $0xb8] sm:$0xff]
      %v866 = vld [vmem:[%s841 + $0xc0] sm:$0xff]
      %v867 = vld [vmem:[%s841 + $0xc8] sm:$0xff]
      %v868 = vld [vmem:[%s841 + $0xd0] sm:$0xff]
      %v869 = vld [vmem:[%s841 + $0xd8] sm:$0xff]
      %v870 = vld [vmem:[%s841 + $0xe0] sm:$0xff]
      %v871 = vld [vmem:[%s841 + $0xe8] sm:$0xff]
      %v872 = vld [vmem:[%s841 + $0xf0] sm:$0xff]
      %v873 = vld [vmem:[%s841 + $0xf8] sm:$0xff]
      %v906 = vunpack.c.l.b16 %v842
      %v907 = vunpack.c.h.b16 %v842
      %v908 = vunpack.c.l.b16 %v843
      %v909 = vunpack.c.h.b16 %v843
      %v910 = vunpack.c.l.b16 %v844
      %v911 = vunpack.c.h.b16 %v844
      %v912 = vunpack.c.l.b16 %v845
      %v913 = vunpack.c.h.b16 %v845
      %v914 = vunpack.c.l.b16 %v846
      %v915 = vunpack.c.h.b16 %v846
      %v916 = vunpack.c.l.b16 %v847
      %v917 = vunpack.c.h.b16 %v847
      %v918 = vunpack.c.l.b16 %v848
      %v919 = vunpack.c.h.b16 %v848
      %v920 = vunpack.c.l.b16 %v849
      %v921 = vunpack.c.h.b16 %v849
      %v922 = vunpack.c.l.b16 %v850
      %v923 = vunpack.c.h.b16 %v850
      %v924 = vunpack.c.l.b16 %v851
      %v925 = vunpack.c.h.b16 %v851
      %v926 = vunpack.c.l.b16 %v852
      %v927 = vunpack.c.h.b16 %v852
      %v928 = vunpack.c.l.b16 %v853
      %v929 = vunpack.c.h.b16 %v853
      %v930 = vunpack.c.l.b16 %v854
      %v931 = vunpack.c.h.b16 %v854
      %v932 = vunpack.c.l.b16 %v855
      %v933 = vunpack.c.h.b16 %v855
      %v934 = vunpack.c.l.b16 %v856
      %v935 = vunpack.c.h.b16 %v856
      %v936 = vunpack.c.l.b16 %v857
      %v937 = vunpack.c.h.b16 %v857
      %v938 = vunpack.c.l.b16 %v858
      %v939 = vunpack.c.h.b16 %v858
      %v940 = vunpack.c.l.b16 %v859
      %v941 = vunpack.c.h.b16 %v859
      %v942 = vunpack.c.l.b16 %v860
      %v943 = vunpack.c.h.b16 %v860
      %v944 = vunpack.c.l.b16 %v861
      %v945 = vunpack.c.h.b16 %v861
      %v946 = vunpack.c.l.b16 %v862
      %v947 = vunpack.c.h.b16 %v862
      %v948 = vunpack.c.l.b16 %v863
      %v949 = vunpack.c.h.b16 %v863
      %v950 = vunpack.c.l.b16 %v864
      %v951 = vunpack.c.h.b16 %v864
      %v952 = vunpack.c.l.b16 %v865
      %v953 = vunpack.c.h.b16 %v865
      %v954 = vunpack.c.l.b16 %v866
      %v955 = vunpack.c.h.b16 %v866
      %v956 = vunpack.c.l.b16 %v867
      %v957 = vunpack.c.h.b16 %v867
      %v958 = vunpack.c.l.b16 %v868
      %v959 = vunpack.c.h.b16 %v868
      %v960 = vunpack.c.l.b16 %v869
      %v961 = vunpack.c.h.b16 %v869
      %v962 = vunpack.c.l.b16 %v870
      %v963 = vunpack.c.h.b16 %v870
      %v964 = vunpack.c.l.b16 %v871
      %v965 = vunpack.c.h.b16 %v871
      %v966 = vunpack.c.l.b16 %v872
      %v967 = vunpack.c.h.b16 %v872
      %v968 = vunpack.c.l.b16 %v873
      %v969 = vunpack.c.h.b16 %v873
      %v970 = vpack.c.b16 %v908, %v906
      %v971 = vpack.c.b16 %v909, %v907
      %v972 = vpack.c.b16 %v912, %v910
      %v973 = vpack.c.b16 %v913, %v911
      %v974 = vpack.c.b16 %v916, %v914
      %v975 = vpack.c.b16 %v917, %v915
      %v976 = vpack.c.b16 %v920, %v918
      %v977 = vpack.c.b16 %v921, %v919
      %v978 = vpack.c.b16 %v924, %v922
      %v979 = vpack.c.b16 %v925, %v923
      %v980 = vpack.c.b16 %v928, %v926
      %v981 = vpack.c.b16 %v929, %v927
      %v982 = vpack.c.b16 %v932, %v930
      %v983 = vpack.c.b16 %v933, %v931
      %v984 = vpack.c.b16 %v936, %v934
      %v985 = vpack.c.b16 %v937, %v935
      %v986 = vpack.c.b16 %v940, %v938
      %v987 = vpack.c.b16 %v941, %v939
      %v988 = vpack.c.b16 %v944, %v942
      %v989 = vpack.c.b16 %v945, %v943
      %v990 = vpack.c.b16 %v948, %v946
      %v991 = vpack.c.b16 %v949, %v947
      %v992 = vpack.c.b16 %v952, %v950
      %v993 = vpack.c.b16 %v953, %v951
      %v994 = vpack.c.b16 %v956, %v954
      %v995 = vpack.c.b16 %v957, %v955
      %v996 = vpack.c.b16 %v960, %v958
      %v997 = vpack.c.b16 %v961, %v959
      %v998 = vpack.c.b16 %v964, %v962
      %v999 = vpack.c.b16 %v965, %v963
      %v1000 = vpack.c.b16 %v968, %v966
      %v1001 = vpack.c.b16 %v969, %v967
      %1034 = vmatprep.subr.bf16.mxu0 %v985
      %1035 = vmatpush1.bf16.msra.mxu0 %v984
      %1036 = vmatprep.subr.bf16.mxu0 %v983
      %1037 = vmatpush1.bf16.msra.mxu0 %v982
      %1038 = vmatprep.subr.bf16.mxu0 %v981
      %1039 = vmatpush1.bf16.msra.mxu0 %v980
      %1040 = vmatprep.subr.bf16.mxu0 %v979
      %1041 = vmatpush1.bf16.msra.mxu0 %v978
      %1042 = vmatprep.subr.bf16.mxu0 %v977
      %1043 = vmatpush1.bf16.msra.mxu0 %v976
      %1044 = vmatprep.subr.bf16.mxu0 %v975
      %1045 = vmatpush1.bf16.msra.mxu0 %v974
      %1046 = vmatprep.subr.bf16.mxu0 %v973
      %1047 = vmatpush1.bf16.msra.mxu0 %v972
      %1048 = vmatprep.subr.bf16.mxu0 %v971
      %1049 = vmatpush1.bf16.msra.mxu0 %v970
      %1050 = vmatprep.subr.bf16.mxu0 %v1001
      %1051 = vmatpush2.bf16.msra.mxu0 %v1000
      %1052 = vmatprep.subr.bf16.mxu0 %v999
      %1053 = vmatpush2.bf16.msra.mxu0 %v998
      %1054 = vmatprep.subr.bf16.mxu0 %v997
      %1055 = vmatpush2.bf16.msra.mxu0 %v996
      %1056 = vmatprep.subr.bf16.mxu0 %v995
      %1057 = vmatpush2.bf16.msra.mxu0 %v994
      %1058 = vmatprep.subr.bf16.mxu0 %v993
      %1059 = vmatpush2.bf16.msra.mxu0 %v992
      %1060 = vmatprep.subr.bf16.mxu0 %v991
      %1061 = vmatpush2.bf16.msra.mxu0 %v990
      %1062 = vmatprep.subr.bf16.mxu0 %v989
      %1063 = vmatpush2.bf16.msra.mxu0 %v988
      %1064 = vmatprep.subr.bf16.mxu0 %v987
      %1065 = vmatpush2.bf16.msra.mxu0 %v986
      %1066 = vmatprep.mubr.bf16.mxu0 %v294
      %1067 = vmatmul.mubr.bf16.gmra.mxu0 %v293
      %v1068 = vpop.f32.mrf.mxu0
      %v1069 = vadd.f32 0.0, %v1068
      %v1070 = vpop.f32.mrf.mxu0
      %v1071 = vadd.f32 0.0, %v1070
      %v1072 = vpop.f32.mrf.mxu0
      %v1073 = vpop.f32.mrf.mxu0
      %1074 = vdwg.mxu0
      %s1075 = scalar_lea.vmem %s2, 8
      %v1076 = vld [vmem:[%s1075] sm:$0xf]
      %v1077 = vpack.c.bf16 %v1069, %v1069
      %v1078 = vpack.c.bf16 %v1071, %v1071
      %v1080 = vsel %vm739, %v1076, 0
      %v1083 = vsel %vm743, %v1077, 0
      %v1086 = vsel %vm743, %v1078, 0
      %1088 = vmatprep.subr.bf16.mxu0 0
      %1089 = vmatpush1.bf16.msra.mxu0 0
      %1090 = vmatprep.subr.bf16.mxu0 0
      %1091 = vmatpush1.bf16.msra.mxu0 0
      %1092 = vmatprep.subr.bf16.mxu0 0
      %1093 = vmatpush1.bf16.msra.mxu0 0
      %1094 = vmatprep.subr.bf16.mxu0 0
      %1095 = vmatpush1.bf16.msra.mxu0 0
      %1096 = vmatprep.subr.bf16.mxu0 0
      %1097 = vmatpush1.bf16.msra.mxu0 0
      %1098 = vmatprep.subr.bf16.mxu0 0
      %1099 = vmatpush1.bf16.msra.mxu0 0
      %1100 = vmatprep.subr.bf16.mxu0 0
      %1101 = vmatpush1.bf16.msra.mxu0 0
      %1102 = vmatprep.subr.bf16.mxu0 %v1086
      %1103 = vmatpush1.bf16.msra.mxu0 %v1083
      %1104 = vmatprep.subr.bf16.mxu0 0
      %1105 = vmatpush2.bf16.msra.mxu0 0
      %1106 = vmatprep.subr.bf16.mxu0 0
      %1107 = vmatpush2.bf16.msra.mxu0 0
      %1108 = vmatprep.subr.bf16.mxu0 0
      %1109 = vmatpush2.bf16.msra.mxu0 0
      %1110 = vmatprep.subr.bf16.mxu0 0
      %1111 = vmatpush2.bf16.msra.mxu0 0
      %1112 = vmatprep.subr.bf16.mxu0 0
      %1113 = vmatpush2.bf16.msra.mxu0 0
      %1114 = vmatprep.subr.bf16.mxu0 0
      %1115 = vmatpush2.bf16.msra.mxu0 0
      %1116 = vmatprep.subr.bf16.mxu0 0
      %1117 = vmatpush2.bf16.msra.mxu0 0
      %1118 = vmatprep.subr.bf16.mxu0 0
      %1119 = vmatpush2.bf16.msra.mxu0 0
      %1120 = vmatprep.mubr.bf16.mxu0 0
      %1121 = vmatmul.mubr.bf16.gmra.mxu0 %v1080
      %v1122 = vpop.f32.mrf.mxu0
      %v1123 = vadd.f32 0.0, %v1122
      %v1124 = vpop.f32.mrf.mxu0
      %v1125 = vadd.f32 0.0, %v1124
      %v1126 = vpop.f32.mrf.mxu0
      %v1127 = vpop.f32.mrf.mxu0
      %1128 = vdwg.mxu0
      %v1129 = vadd.f32 %v835, %v1123
      %v1130 = vadd.f32 %v837, %v1125
      %v1131 = vld [vmem:[%s5] sm:$0xff]
      %1133 = vset.pattern.permute.xlu0 0
      %1134 = vperm.xlu0 %1133, %v1131
      %v1135 = vpop.permute.xlu0 %1134
      %v1137 = vadd.f32 %v1129, %v1135
      %v1138 = vadd.f32 %v1130, %v1135
      %v1139 = vmax.f32 %v1137, 0.0
      %v1140 = vmax.f32 %v1138, 0.0
      %vm1141 = vcmask 519168
      %1142 = vst.msk [vmem:[#allocation2] sm:$0xf] %vm1141, 0
      %vm1143 = vcmask 1043968
      %1144 = vst.msk [vmem:[#allocation2 + $0x8] sm:$0xf] %vm1143, 0
      %v1145 = vpack.c.bf16 %v1139, %v1139
      %v1146 = vpack.c.bf16 %v1140, %v1140
      %v1149 = vunpack.c.l.b16 %v1145
      %v1150 = vunpack.c.l.b16 %v1146
      %v1151 = vpack.c.b16 %v1150, %v1149
      %1152 = vrot.lane.b32.xlu0 %v1151, 64
      %v1153 = vpop.permute.xlu0 %1152
      %v1154 = vrot.slane %v1153, 4
      %vm1155 = vcmask 523264
      %v1156 = vsel %vm1155, %v1154, %v1153
      %vm1159 = vcmask 1047556
      %vm1160 = vmor %vm1159, %vm1143
      %1161 = vst.msk [vmem:[#allocation2] sm:$0xff] %vm1160, %v1156
      %1162 = vst.msk [vmem:[#allocation2 + $0x8] sm:$0xf] %vm1141, %v1154
      %v1163 = vld [vmem:[%s3] sm:$0xf]
      %v1164 = vld [vmem:[#allocation2] sm:$0xff]
      %s1165 = scalar_lea.vmem %s3, 4
      %v1166 = vld [vmem:[%s1165] sm:$0xf]
      %v1167 = vld [vmem:[#allocation2] sm:$0xff]
      %v1168 = vld [vmem:[#allocation2 + $0x8] sm:$0xf]
      %v1171 = vunpack.c.l.b16 %v1167
      %v1172 = vunpack.c.h.b16 %v1167
      %v1173 = vunpack.c.l.b16 %v1168
      %v1174 = vpack.c.b16 %v1171, %v1171
      %v1175 = vpack.c.b16 %v1172, %v1172
      %v1176 = vpack.c.b16 %v1173, %v1173
      %1177 = vrot.lane.b32.xlu0 %v1174, 112
      %v1178 = vpop.permute.xlu0 %1177
      %1179 = vrot.lane.b32.xlu0 %v1175, 112
      %v1180 = vpop.permute.xlu0 %1179
      %1181 = vrot.lane.b32.xlu0 %v1176, 112
      %v1182 = vpop.permute.xlu0 %1181
      %vm1183 = vcmask 916480
      %v1184 = vsel %vm1183, %v1178, %v1180
      %v1185 = vsel %vm1183, %v1180, %v1182
      %vm1186 = vcmask 64512
      %v1188 = vsel %vm1186, %v1166, 0
      %vm1190 = vcmask 1043456
      %v1192 = vsel %vm1190, %v1184, 0
      %v1195 = vsel %vm1190, %v1185, 0
      %1197 = vmatprep.subr.bf16.mxu0 0
      %1198 = vmatpush1.bf16.msra.mxu0 0
      %1199 = vmatprep.subr.bf16.mxu0 0
      %1200 = vmatpush1.bf16.msra.mxu0 0
      %1201 = vmatprep.subr.bf16.mxu0 0
      %1202 = vmatpush1.bf16.msra.mxu0 0
      %1203 = vmatprep.subr.bf16.mxu0 0
      %1204 = vmatpush1.bf16.msra.mxu0 0
      %1205 = vmatprep.subr.bf16.mxu0 0
      %1206 = vmatpush1.bf16.msra.mxu0 0
      %1207 = vmatprep.subr.bf16.mxu0 0
      %1208 = vmatpush1.bf16.msra.mxu0 0
      %1209 = vmatprep.subr.bf16.mxu0 0
      %1210 = vmatpush1.bf16.msra.mxu0 0
      %1211 = vmatprep.subr.bf16.mxu0 %v1195
      %1212 = vmatpush1.bf16.msra.mxu0 %v1192
      %1213 = vmatprep.subr.bf16.mxu0 0
      %1214 = vmatpush2.bf16.msra.mxu0 0
      %1215 = vmatprep.subr.bf16.mxu0 0
      %1216 = vmatpush2.bf16.msra.mxu0 0
      %1217 = vmatprep.subr.bf16.mxu0 0
      %1218 = vmatpush2.bf16.msra.mxu0 0
      %1219 = vmatprep.subr.bf16.mxu0 0
      %1220 = vmatpush2.bf16.msra.mxu0 0
      %1221 = vmatprep.subr.bf16.mxu0 0
      %1222 = vmatpush2.bf16.msra.mxu0 0
      %1223 = vmatprep.subr.bf16.mxu0 0
      %1224 = vmatpush2.bf16.msra.mxu0 0
      %1225 = vmatprep.subr.bf16.mxu0 0
      %1226 = vmatpush2.bf16.msra.mxu0 0
      %1227 = vmatprep.subr.bf16.mxu0 0
      %1228 = vmatpush2.bf16.msra.mxu0 0
      %1229 = vmatprep.mubr.bf16.mxu0 0
      %1230 = vmatmul.mubr.bf16.gmra.mxu0 %v1188
      %v1231 = vpop.f32.mrf.mxu0
      %v1232 = vadd.f32 0.0, %v1231
      %v1233 = vpop.f32.mrf.mxu0
      %v1234 = vadd.f32 0.0, %v1233
      %v1235 = vpop.f32.mrf.mxu0
      %v1236 = vpop.f32.mrf.mxu0
      %1237 = vdwg.mxu0
      %v1239 = vunpack.c.l.b16 %v1164
      %v1240 = vunpack.c.h.b16 %v1164
      %v1241 = vpack.c.b16 %v1239, %v1239
      %v1242 = vpack.c.b16 %v1240, %v1240
      %v1244 = vsel %vm1186, %v1163, 0
      %v1247 = vsel %vm1190, %v1241, 0
      %v1250 = vsel %vm1190, %v1242, 0
      %1252 = vmatprep.subr.bf16.mxu0 0
      %1253 = vmatpush1.bf16.msra.mxu0 0
      %1254 = vmatprep.subr.bf16.mxu0 0
      %1255 = vmatpush1.bf16.msra.mxu0 0
      %1256 = vmatprep.subr.bf16.mxu0 0
      %1257 = vmatpush1.bf16.msra.mxu0 0
      %1258 = vmatprep.subr.bf16.mxu0 0
      %1259 = vmatpush1.bf16.msra.mxu0 0
      %1260 = vmatprep.subr.bf16.mxu0 0
      %1261 = vmatpush1.bf16.msra.mxu0 0
      %1262 = vmatprep.subr.bf16.mxu0 0
      %1263 = vmatpush1.bf16.msra.mxu0 0
      %1264 = vmatprep.subr.bf16.mxu0 0
      %1265 = vmatpush1.bf16.msra.mxu0 0
      %1266 = vmatprep.subr.bf16.mxu0 %v1250
      %1267 = vmatpush1.bf16.msra.mxu0 %v1247
      %1268 = vmatprep.subr.bf16.mxu0 0
      %1269 = vmatpush2.bf16.msra.mxu0 0
      %1270 = vmatprep.subr.bf16.mxu0 0
      %1271 = vmatpush2.bf16.msra.mxu0 0
      %1272 = vmatprep.subr.bf16.mxu0 0
      %1273 = vmatpush2.bf16.msra.mxu0 0
      %1274 = vmatprep.subr.bf16.mxu0 0
      %1275 = vmatpush2.bf16.msra.mxu0 0
      %1276 = vmatprep.subr.bf16.mxu0 0
      %1277 = vmatpush2.bf16.msra.mxu0 0
      %1278 = vmatprep.subr.bf16.mxu0 0
      %1279 = vmatpush2.bf16.msra.mxu0 0
      %1280 = vmatprep.subr.bf16.mxu0 0
      %1281 = vmatpush2.bf16.msra.mxu0 0
      %1282 = vmatprep.subr.bf16.mxu0 0
      %1283 = vmatpush2.bf16.msra.mxu0 0
      %1284 = vmatprep.mubr.bf16.mxu0 0
      %1285 = vmatmul.mubr.bf16.gmra.mxu0 %v1244
      %v1286 = vpop.f32.mrf.mxu0
      %v1287 = vadd.f32 %v1232, %v1286
      %v1288 = vpop.f32.mrf.mxu0
      %v1289 = vadd.f32 %v1234, %v1288
      %v1290 = vpop.f32.mrf.mxu0
      %v1291 = vpop.f32.mrf.mxu0
      %1292 = vdwg.mxu0
      %s1293 = scalar_lea.vmem %s3, 8
      %v1294 = vld [vmem:[%s1293] sm:$0xf]
      %1295 = vrot.lane.b32.xlu0 %v1174, 96
      %v1296 = vpop.permute.xlu0 %1295
      %1297 = vrot.lane.b32.xlu0 %v1175, 96
      %v1298 = vpop.permute.xlu0 %1297
      %1299 = vrot.lane.b32.xlu0 %v1176, 96
      %v1300 = vpop.permute.xlu0 %1299
      %vm1301 = vcmask 785408
      %v1302 = vsel %vm1301, %v1296, %v1298
      %v1303 = vsel %vm1301, %v1298, %v1300
      %v1305 = vsel %vm1186, %v1294, 0
      %v1308 = vsel %vm1190, %v1302, 0
      %v1311 = vsel %vm1190, %v1303, 0
      %1313 = vmatprep.subr.bf16.mxu0 0
      %1314 = vmatpush1.bf16.msra.mxu0 0
      %1315 = vmatprep.subr.bf16.mxu0 0
      %1316 = vmatpush1.bf16.msra.mxu0 0
      %1317 = vmatprep.subr.bf16.mxu0 0
      %1318 = vmatpush1.bf16.msra.mxu0 0
      %1319 = vmatprep.subr.bf16.mxu0 0
      %1320 = vmatpush1.bf16.msra.mxu0 0
      %1321 = vmatprep.subr.bf16.mxu0 0
      %1322 = vmatpush1.bf16.msra.mxu0 0
      %1323 = vmatprep.subr.bf16.mxu0 0
      %1324 = vmatpush1.bf16.msra.mxu0 0
      %1325 = vmatprep.subr.bf16.mxu0 0
      %1326 = vmatpush1.bf16.msra.mxu0 0
      %1327 = vmatprep.subr.bf16.mxu0 %v1311
      %1328 = vmatpush1.bf16.msra.mxu0 %v1308
      %1329 = vmatprep.subr.bf16.mxu0 0
      %1330 = vmatpush2.bf16.msra.mxu0 0
      %1331 = vmatprep.subr.bf16.mxu0 0
      %1332 = vmatpush2.bf16.msra.mxu0 0
      %1333 = vmatprep.subr.bf16.mxu0 0
      %1334 = vmatpush2.bf16.msra.mxu0 0
      %1335 = vmatprep.subr.bf16.mxu0 0
      %1336 = vmatpush2.bf16.msra.mxu0 0
      %1337 = vmatprep.subr.bf16.mxu0 0
      %1338 = vmatpush2.bf16.msra.mxu0 0
      %1339 = vmatprep.subr.bf16.mxu0 0
      %1340 = vmatpush2.bf16.msra.mxu0 0
      %1341 = vmatprep.subr.bf16.mxu0 0
      %1342 = vmatpush2.bf16.msra.mxu0 0
      %1343 = vmatprep.subr.bf16.mxu0 0
      %1344 = vmatpush2.bf16.msra.mxu0 0
      %1345 = vmatprep.mubr.bf16.mxu0 0
      %1346 = vmatmul.mubr.bf16.gmra.mxu0 %v1305
      %v1347 = vpop.f32.mrf.mxu0
      %v1348 = vadd.f32 0.0, %v1347
      %v1349 = vpop.f32.mrf.mxu0
      %v1350 = vadd.f32 0.0, %v1349
      %v1351 = vpop.f32.mrf.mxu0
      %v1352 = vpop.f32.mrf.mxu0
      %1353 = vdwg.mxu0
      %v1354 = vadd.f32 %v1287, %v1348
      %v1355 = vadd.f32 %v1289, %v1350
      %s1356 = scalar_lea.vmem %s3, 12
      %v1357 = vld [vmem:[%s1356] sm:$0xf]
      %1358 = vrot.lane.b32.xlu0 %v1174, 80
      %v1359 = vpop.permute.xlu0 %1358
      %1360 = vrot.lane.b32.xlu0 %v1175, 80
      %v1361 = vpop.permute.xlu0 %1360
      %1362 = vrot.lane.b32.xlu0 %v1176, 80
      %v1363 = vpop.permute.xlu0 %1362
      %vm1364 = vcmask 654336
      %v1365 = vsel %vm1364, %v1359, %v1361
      %v1366 = vsel %vm1364, %v1361, %v1363
      %v1368 = vsel %vm1186, %v1357, 0
      %v1371 = vsel %vm1190, %v1365, 0
      %v1374 = vsel %vm1190, %v1366, 0
      %1376 = vmatprep.subr.bf16.mxu0 0
      %1377 = vmatpush1.bf16.msra.mxu0 0
      %1378 = vmatprep.subr.bf16.mxu0 0
      %1379 = vmatpush1.bf16.msra.mxu0 0
      %1380 = vmatprep.subr.bf16.mxu0 0
      %1381 = vmatpush1.bf16.msra.mxu0 0
      %1382 = vmatprep.subr.bf16.mxu0 0
      %1383 = vmatpush1.bf16.msra.mxu0 0
      %1384 = vmatprep.subr.bf16.mxu0 0
      %1385 = vmatpush1.bf16.msra.mxu0 0
      %1386 = vmatprep.subr.bf16.mxu0 0
      %1387 = vmatpush1.bf16.msra.mxu0 0
      %1388 = vmatprep.subr.bf16.mxu0 0
      %1389 = vmatpush1.bf16.msra.mxu0 0
      %1390 = vmatprep.subr.bf16.mxu0 %v1374
      %1391 = vmatpush1.bf16.msra.mxu0 %v1371
      %1392 = vmatprep.subr.bf16.mxu0 0
      %1393 = vmatpush2.bf16.msra.mxu0 0
      %1394 = vmatprep.subr.bf16.mxu0 0
      %1395 = vmatpush2.bf16.msra.mxu0 0
      %1396 = vmatprep.subr.bf16.mxu0 0
      %1397 = vmatpush2.bf16.msra.mxu0 0
      %1398 = vmatprep.subr.bf16.mxu0 0
      %1399 = vmatpush2.bf16.msra.mxu0 0
      %1400 = vmatprep.subr.bf16.mxu0 0
      %1401 = vmatpush2.bf16.msra.mxu0 0
      %1402 = vmatprep.subr.bf16.mxu0 0
      %1403 = vmatpush2.bf16.msra.mxu0 0
      %1404 = vmatprep.subr.bf16.mxu0 0
      %1405 = vmatpush2.bf16.msra.mxu0 0
      %1406 = vmatprep.subr.bf16.mxu0 0
      %1407 = vmatpush2.bf16.msra.mxu0 0
      %1408 = vmatprep.mubr.bf16.mxu0 0
      %1409 = vmatmul.mubr.bf16.gmra.mxu0 %v1368
      %v1410 = vpop.f32.mrf.mxu0
      %v1411 = vadd.f32 0.0, %v1410
      %v1412 = vpop.f32.mrf.mxu0
      %v1413 = vadd.f32 0.0, %v1412
      %v1414 = vpop.f32.mrf.mxu0
      %v1415 = vpop.f32.mrf.mxu0
      %1416 = vdwg.mxu0
      %v1417 = vadd.f32 %v1354, %v1411
      %v1418 = vadd.f32 %v1355, %v1413
      %s1419 = scalar_lea.vmem %s3, 16
      %v1420 = vld [vmem:[%s1419] sm:$0xf]
      %1421 = vrot.lane.b32.xlu0 %v1174, 64
      %v1422 = vpop.permute.xlu0 %1421
      %1423 = vrot.lane.b32.xlu0 %v1175, 64
      %v1424 = vpop.permute.xlu0 %1423
      %1425 = vrot.lane.b32.xlu0 %v1176, 64
      %v1426 = vpop.permute.xlu0 %1425
      %v1427 = vsel %vm1155, %v1422, %v1424
      %v1428 = vsel %vm1155, %v1424, %v1426
      %v1430 = vsel %vm1186, %v1420, 0
      %v1433 = vsel %vm1190, %v1427, 0
      %v1436 = vsel %vm1190, %v1428, 0
      %1438 = vmatprep.subr.bf16.mxu0 0
      %1439 = vmatpush1.bf16.msra.mxu0 0
      %1440 = vmatprep.subr.bf16.mxu0 0
      %1441 = vmatpush1.bf16.msra.mxu0 0
      %1442 = vmatprep.subr.bf16.mxu0 0
      %1443 = vmatpush1.bf16.msra.mxu0 0
      %1444 = vmatprep.subr.bf16.mxu0 0
      %1445 = vmatpush1.bf16.msra.mxu0 0
      %1446 = vmatprep.subr.bf16.mxu0 0
      %1447 = vmatpush1.bf16.msra.mxu0 0
      %1448 = vmatprep.subr.bf16.mxu0 0
      %1449 = vmatpush1.bf16.msra.mxu0 0
      %1450 = vmatprep.subr.bf16.mxu0 0
      %1451 = vmatpush1.bf16.msra.mxu0 0
      %1452 = vmatprep.subr.bf16.mxu0 %v1436
      %1453 = vmatpush1.bf16.msra.mxu0 %v1433
      %1454 = vmatprep.subr.bf16.mxu0 0
      %1455 = vmatpush2.bf16.msra.mxu0 0
      %1456 = vmatprep.subr.bf16.mxu0 0
      %1457 = vmatpush2.bf16.msra.mxu0 0
      %1458 = vmatprep.subr.bf16.mxu0 0
      %1459 = vmatpush2.bf16.msra.mxu0 0
      %1460 = vmatprep.subr.bf16.mxu0 0
      %1461 = vmatpush2.bf16.msra.mxu0 0
      %1462 = vmatprep.subr.bf16.mxu0 0
      %1463 = vmatpush2.bf16.msra.mxu0 0
      %1464 = vmatprep.subr.bf16.mxu0 0
      %1465 = vmatpush2.bf16.msra.mxu0 0
      %1466 = vmatprep.subr.bf16.mxu0 0
      %1467 = vmatpush2.bf16.msra.mxu0 0
      %1468 = vmatprep.subr.bf16.mxu0 0
      %1469 = vmatpush2.bf16.msra.mxu0 0
      %1470 = vmatprep.mubr.bf16.mxu0 0
      %1471 = vmatmul.mubr.bf16.gmra.mxu0 %v1430
      %v1472 = vpop.f32.mrf.mxu0
      %v1473 = vadd.f32 0.0, %v1472
      %v1474 = vpop.f32.mrf.mxu0
      %v1475 = vadd.f32 0.0, %v1474
      %v1476 = vpop.f32.mrf.mxu0
      %v1477 = vpop.f32.mrf.mxu0
      %1478 = vdwg.mxu0
      %v1479 = vadd.f32 %v1417, %v1473
      %v1480 = vadd.f32 %v1418, %v1475
      %s1481 = scalar_lea.vmem %s3, 20
      %v1482 = vld [vmem:[%s1481] sm:$0xf]
      %1483 = vrot.lane.b32.xlu0 %v1174, 48
      %v1484 = vpop.permute.xlu0 %1483
      %1485 = vrot.lane.b32.xlu0 %v1175, 48
      %v1486 = vpop.permute.xlu0 %1485
      %1487 = vrot.lane.b32.xlu0 %v1176, 48
      %v1488 = vpop.permute.xlu0 %1487
      %vm1489 = vcmask 392192
      %v1490 = vsel %vm1489, %v1484, %v1486
      %v1491 = vsel %vm1489, %v1486, %v1488
      %v1493 = vsel %vm1186, %v1482, 0
      %v1496 = vsel %vm1190, %v1490, 0
      %v1499 = vsel %vm1190, %v1491, 0
      %1501 = vmatprep.subr.bf16.mxu0 0
      %1502 = vmatpush1.bf16.msra.mxu0 0
      %1503 = vmatprep.subr.bf16.mxu0 0
      %1504 = vmatpush1.bf16.msra.mxu0 0
      %1505 = vmatprep.subr.bf16.mxu0 0
      %1506 = vmatpush1.bf16.msra.mxu0 0
      %1507 = vmatprep.subr.bf16.mxu0 0
      %1508 = vmatpush1.bf16.msra.mxu0 0
      %1509 = vmatprep.subr.bf16.mxu0 0
      %1510 = vmatpush1.bf16.msra.mxu0 0
      %1511 = vmatprep.subr.bf16.mxu0 0
      %1512 = vmatpush1.bf16.msra.mxu0 0
      %1513 = vmatprep.subr.bf16.mxu0 0
      %1514 = vmatpush1.bf16.msra.mxu0 0
      %1515 = vmatprep.subr.bf16.mxu0 %v1499
      %1516 = vmatpush1.bf16.msra.mxu0 %v1496
      %1517 = vmatprep.subr.bf16.mxu0 0
      %1518 = vmatpush2.bf16.msra.mxu0 0
      %1519 = vmatprep.subr.bf16.mxu0 0
      %1520 = vmatpush2.bf16.msra.mxu0 0
      %1521 = vmatprep.subr.bf16.mxu0 0
      %1522 = vmatpush2.bf16.msra.mxu0 0
      %1523 = vmatprep.subr.bf16.mxu0 0
      %1524 = vmatpush2.bf16.msra.mxu0 0
      %1525 = vmatprep.subr.bf16.mxu0 0
      %1526 = vmatpush2.bf16.msra.mxu0 0
      %1527 = vmatprep.subr.bf16.mxu0 0
      %1528 = vmatpush2.bf16.msra.mxu0 0
      %1529 = vmatprep.subr.bf16.mxu0 0
      %1530 = vmatpush2.bf16.msra.mxu0 0
      %1531 = vmatprep.subr.bf16.mxu0 0
      %1532 = vmatpush2.bf16.msra.mxu0 0
      %1533 = vmatprep.mubr.bf16.mxu0 0
      %1534 = vmatmul.mubr.bf16.gmra.mxu0 %v1493
      %v1535 = vpop.f32.mrf.mxu0
      %v1536 = vadd.f32 0.0, %v1535
      %v1537 = vpop.f32.mrf.mxu0
      %v1538 = vadd.f32 0.0, %v1537
      %v1539 = vpop.f32.mrf.mxu0
      %v1540 = vpop.f32.mrf.mxu0
      %1541 = vdwg.mxu0
      %v1542 = vadd.f32 %v1479, %v1536
      %v1543 = vadd.f32 %v1480, %v1538
      %s1544 = scalar_lea.vmem %s3, 24
      %v1545 = vld [vmem:[%s1544] sm:$0xf]
      %1546 = vrot.lane.b32.xlu0 %v1174, 32
      %v1547 = vpop.permute.xlu0 %1546
      %1548 = vrot.lane.b32.xlu0 %v1175, 32
      %v1549 = vpop.permute.xlu0 %1548
      %1550 = vrot.lane.b32.xlu0 %v1176, 32
      %v1551 = vpop.permute.xlu0 %1550
      %vm1552 = vcmask 261120
      %v1553 = vsel %vm1552, %v1547, %v1549
      %v1554 = vsel %vm1552, %v1549, %v1551
      %v1556 = vsel %vm1186, %v1545, 0
      %v1559 = vsel %vm1190, %v1553, 0
      %v1562 = vsel %vm1190, %v1554, 0
      %1564 = vmatprep.subr.bf16.mxu0 0
      %1565 = vmatpush1.bf16.msra.mxu0 0
      %1566 = vmatprep.subr.bf16.mxu0 0
      %1567 = vmatpush1.bf16.msra.mxu0 0
      %1568 = vmatprep.subr.bf16.mxu0 0
      %1569 = vmatpush1.bf16.msra.mxu0 0
      %1570 = vmatprep.subr.bf16.mxu0 0
      %1571 = vmatpush1.bf16.msra.mxu0 0
      %1572 = vmatprep.subr.bf16.mxu0 0
      %1573 = vmatpush1.bf16.msra.mxu0 0
      %1574 = vmatprep.subr.bf16.mxu0 0
      %1575 = vmatpush1.bf16.msra.mxu0 0
      %1576 = vmatprep.subr.bf16.mxu0 0
      %1577 = vmatpush1.bf16.msra.mxu0 0
      %1578 = vmatprep.subr.bf16.mxu0 %v1562
      %1579 = vmatpush1.bf16.msra.mxu0 %v1559
      %1580 = vmatprep.subr.bf16.mxu0 0
      %1581 = vmatpush2.bf16.msra.mxu0 0
      %1582 = vmatprep.subr.bf16.mxu0 0
      %1583 = vmatpush2.bf16.msra.mxu0 0
      %1584 = vmatprep.subr.bf16.mxu0 0
      %1585 = vmatpush2.bf16.msra.mxu0 0
      %1586 = vmatprep.subr.bf16.mxu0 0
      %1587 = vmatpush2.bf16.msra.mxu0 0
      %1588 = vmatprep.subr.bf16.mxu0 0
      %1589 = vmatpush2.bf16.msra.mxu0 0
      %1590 = vmatprep.subr.bf16.mxu0 0
      %1591 = vmatpush2.bf16.msra.mxu0 0
      %1592 = vmatprep.subr.bf16.mxu0 0
      %1593 = vmatpush2.bf16.msra.mxu0 0
      %1594 = vmatprep.subr.bf16.mxu0 0
      %1595 = vmatpush2.bf16.msra.mxu0 0
      %1596 = vmatprep.mubr.bf16.mxu0 0
      %1597 = vmatmul.mubr.bf16.gmra.mxu0 %v1556
      %v1598 = vpop.f32.mrf.mxu0
      %v1599 = vadd.f32 0.0, %v1598
      %v1600 = vpop.f32.mrf.mxu0
      %v1601 = vadd.f32 0.0, %v1600
      %v1602 = vpop.f32.mrf.mxu0
      %v1603 = vpop.f32.mrf.mxu0
      %1604 = vdwg.mxu0
      %v1605 = vadd.f32 %v1542, %v1599
      %v1606 = vadd.f32 %v1543, %v1601
      %s1607 = scalar_lea.vmem %s3, 28
      %v1608 = vld [vmem:[%s1607] sm:$0xf]
      %1609 = vrot.lane.b32.xlu0 %v1174, 16
      %v1610 = vpop.permute.xlu0 %1609
      %1611 = vrot.lane.b32.xlu0 %v1175, 16
      %v1612 = vpop.permute.xlu0 %1611
      %1613 = vrot.lane.b32.xlu0 %v1176, 16
      %v1614 = vpop.permute.xlu0 %1613
      %vm1615 = vcmask 130048
      %v1616 = vsel %vm1615, %v1610, %v1612
      %v1617 = vsel %vm1615, %v1612, %v1614
      %v1619 = vsel %vm1186, %v1608, 0
      %v1622 = vsel %vm1190, %v1616, 0
      %v1625 = vsel %vm1190, %v1617, 0
      %1627 = vmatprep.subr.bf16.mxu0 0
      %1628 = vmatpush1.bf16.msra.mxu0 0
      %1629 = vmatprep.subr.bf16.mxu0 0
      %1630 = vmatpush1.bf16.msra.mxu0 0
      %1631 = vmatprep.subr.bf16.mxu0 0
      %1632 = vmatpush1.bf16.msra.mxu0 0
      %1633 = vmatprep.subr.bf16.mxu0 0
      %1634 = vmatpush1.bf16.msra.mxu0 0
      %1635 = vmatprep.subr.bf16.mxu0 0
      %1636 = vmatpush1.bf16.msra.mxu0 0
      %1637 = vmatprep.subr.bf16.mxu0 0
      %1638 = vmatpush1.bf16.msra.mxu0 0
      %1639 = vmatprep.subr.bf16.mxu0 0
      %1640 = vmatpush1.bf16.msra.mxu0 0
      %1641 = vmatprep.subr.bf16.mxu0 %v1625
      %1642 = vmatpush1.bf16.msra.mxu0 %v1622
      %1643 = vmatprep.subr.bf16.mxu0 0
      %1644 = vmatpush2.bf16.msra.mxu0 0
      %1645 = vmatprep.subr.bf16.mxu0 0
      %1646 = vmatpush2.bf16.msra.mxu0 0
      %1647 = vmatprep.subr.bf16.mxu0 0
      %1648 = vmatpush2.bf16.msra.mxu0 0
      %1649 = vmatprep.subr.bf16.mxu0 0
      %1650 = vmatpush2.bf16.msra.mxu0 0
      %1651 = vmatprep.subr.bf16.mxu0 0
      %1652 = vmatpush2.bf16.msra.mxu0 0
      %1653 = vmatprep.subr.bf16.mxu0 0
      %1654 = vmatpush2.bf16.msra.mxu0 0
      %1655 = vmatprep.subr.bf16.mxu0 0
      %1656 = vmatpush2.bf16.msra.mxu0 0
      %1657 = vmatprep.subr.bf16.mxu0 0
      %1658 = vmatpush2.bf16.msra.mxu0 0
      %1659 = vmatprep.mubr.bf16.mxu0 0
      %1660 = vmatmul.mubr.bf16.gmra.mxu0 %v1619
      %v1661 = vpop.f32.mrf.mxu0
      %v1662 = vadd.f32 0.0, %v1661
      %v1663 = vpop.f32.mrf.mxu0
      %v1664 = vadd.f32 0.0, %v1663
      %v1665 = vpop.f32.mrf.mxu0
      %v1666 = vpop.f32.mrf.mxu0
      %1667 = vdwg.mxu0
      %v1668 = vadd.f32 %v1605, %v1662
      %v1669 = vadd.f32 %v1606, %v1664
      %s1670 = scalar_lea.vmem %s3, 32
      %v1671 = vld [vmem:[%s1670] sm:$0xf]
      %v1672 = vld [vmem:[#allocation2 + $0x4] sm:$0xff]
      %v1674 = vunpack.c.l.b16 %v1672
      %v1675 = vunpack.c.h.b16 %v1672
      %v1676 = vpack.c.b16 %v1674, %v1674
      %v1677 = vpack.c.b16 %v1675, %v1675
      %v1679 = vsel %vm1186, %v1671, 0
      %v1682 = vsel %vm1190, %v1676, 0
      %v1685 = vsel %vm1190, %v1677, 0
      %1687 = vmatprep.subr.bf16.mxu0 0
      %1688 = vmatpush1.bf16.msra.mxu0 0
      %1689 = vmatprep.subr.bf16.mxu0 0
      %1690 = vmatpush1.bf16.msra.mxu0 0
      %1691 = vmatprep.subr.bf16.mxu0 0
      %1692 = vmatpush1.bf16.msra.mxu0 0
      %1693 = vmatprep.subr.bf16.mxu0 0
      %1694 = vmatpush1.bf16.msra.mxu0 0
      %1695 = vmatprep.subr.bf16.mxu0 0
      %1696 = vmatpush1.bf16.msra.mxu0 0
      %1697 = vmatprep.subr.bf16.mxu0 0
      %1698 = vmatpush1.bf16.msra.mxu0 0
      %1699 = vmatprep.subr.bf16.mxu0 0
      %1700 = vmatpush1.bf16.msra.mxu0 0
      %1701 = vmatprep.subr.bf16.mxu0 %v1685
      %1702 = vmatpush1.bf16.msra.mxu0 %v1682
      %1703 = vmatprep.subr.bf16.mxu0 0
      %1704 = vmatpush2.bf16.msra.mxu0 0
      %1705 = vmatprep.subr.bf16.mxu0 0
      %1706 = vmatpush2.bf16.msra.mxu0 0
      %1707 = vmatprep.subr.bf16.mxu0 0
      %1708 = vmatpush2.bf16.msra.mxu0 0
      %1709 = vmatprep.subr.bf16.mxu0 0
      %1710 = vmatpush2.bf16.msra.mxu0 0
      %1711 = vmatprep.subr.bf16.mxu0 0
      %1712 = vmatpush2.bf16.msra.mxu0 0
      %1713 = vmatprep.subr.bf16.mxu0 0
      %1714 = vmatpush2.bf16.msra.mxu0 0
      %1715 = vmatprep.subr.bf16.mxu0 0
      %1716 = vmatpush2.bf16.msra.mxu0 0
      %1717 = vmatprep.subr.bf16.mxu0 0
      %1718 = vmatpush2.bf16.msra.mxu0 0
      %1719 = vmatprep.mubr.bf16.mxu0 0
      %1720 = vmatmul.mubr.bf16.gmra.mxu0 %v1679
      %v1721 = vpop.f32.mrf.mxu0
      %v1722 = vadd.f32 0.0, %v1721
      %v1723 = vpop.f32.mrf.mxu0
      %v1724 = vadd.f32 0.0, %v1723
      %v1725 = vpop.f32.mrf.mxu0
      %v1726 = vpop.f32.mrf.mxu0
      %1727 = vdwg.mxu0
      %v1728 = vadd.f32 %v1668, %v1722
      %v1729 = vadd.f32 %v1669, %v1724
      %s1730 = scalar_lea.vmem %s5, 8
      %v1731 = vld [vmem:[%s1730] sm:$0xff]
      %1733 = vset.pattern.permute.xlu0 0
      %1734 = vperm.xlu0 %1733, %v1731
      %v1735 = vpop.permute.xlu0 %1734
      %v1737 = vadd.f32 %v1728, %v1735
      %v1738 = vadd.f32 %v1729, %v1735
      %v1739 = vmax.f32 %v1737, 0.0
      %v1740 = vmax.f32 %v1738, 0.0
      %v1741 = vld [vmem:[%s4] sm:$0xf]
      %s1742 = scalar_lea.vmem %s5, 16
      %v1743 = vld [vmem:[%s1742] sm:$0xff]
      %1745 = vset.pattern.permute.xlu0 0
      %1746 = vperm.xlu0 %1745, %v1743
      %v1747 = vpop.permute.xlu0 %1746
      %v1750 = vsel %vm739, %v1741, 0
      %v1753 = vsel %vm743, %v293, 0
      %v1756 = vsel %vm743, %v294, 0
      %1758 = vmatprep.subr.bf16.mxu0 0
      %1759 = vmatpush1.bf16.msra.mxu0 0
      %1760 = vmatprep.subr.bf16.mxu0 0
      %1761 = vmatpush1.bf16.msra.mxu0 0
      %1762 = vmatprep.subr.bf16.mxu0 0
      %1763 = vmatpush1.bf16.msra.mxu0 0
      %1764 = vmatprep.subr.bf16.mxu0 0
      %1765 = vmatpush1.bf16.msra.mxu0 0
      %1766 = vmatprep.subr.bf16.mxu0 0
      %1767 = vmatpush1.bf16.msra.mxu0 0
      %1768 = vmatprep.subr.bf16.mxu0 0
      %1769 = vmatpush1.bf16.msra.mxu0 0
      %1770 = vmatprep.subr.bf16.mxu0 0
      %1771 = vmatpush1.bf16.msra.mxu0 0
      %1772 = vmatprep.subr.bf16.mxu0 %v1756
      %1773 = vmatpush1.bf16.msra.mxu0 %v1753
      %1774 = vmatprep.subr.bf16.mxu0 0
      %1775 = vmatpush2.bf16.msra.mxu0 0
      %1776 = vmatprep.subr.bf16.mxu0 0
      %1777 = vmatpush2.bf16.msra.mxu0 0
      %1778 = vmatprep.subr.bf16.mxu0 0
      %1779 = vmatpush2.bf16.msra.mxu0 0
      %1780 = vmatprep.subr.bf16.mxu0 0
      %1781 = vmatpush2.bf16.msra.mxu0 0
      %1782 = vmatprep.subr.bf16.mxu0 0
      %1783 = vmatpush2.bf16.msra.mxu0 0
      %1784 = vmatprep.subr.bf16.mxu0 0
      %1785 = vmatpush2.bf16.msra.mxu0 0
      %1786 = vmatprep.subr.bf16.mxu0 0
      %1787 = vmatpush2.bf16.msra.mxu0 0
      %1788 = vmatprep.subr.bf16.mxu0 0
      %1789 = vmatpush2.bf16.msra.mxu0 0
      %1790 = vmatprep.mubr.bf16.mxu0 0
      %1791 = vmatmul.mubr.bf16.gmra.mxu0 %v1750
      %v1792 = vpop.f32.mrf.mxu0
      %v1793 = vadd.f32 %v1747, %v1792
      %v1794 = vpop.f32.mrf.mxu0
      %v1795 = vadd.f32 %v1747, %v1794
      %v1796 = vpop.f32.mrf.mxu0
      %v1797 = vpop.f32.mrf.mxu0
      %1798 = vdwg.mxu0
      %v1799 = vmax.f32 %v1793, 0.0
      %v1800 = vmax.f32 %v1795, 0.0
      %v1801 = vadd.f32 %v1739, %v1799
      %v1802 = vadd.f32 %v1740, %v1800
      %1803 = vst [vmem:[%s251] sm:$0xff] %v1801
      %1804 = vst [vmem:[%s251 + $0x8] sm:$0xff] %v1802
      %p1805 = scmp.lt.s32.totalorder %s17, 1
      %s1806 = scalar_select %p1805, %s17, 1
      %s1807 = smul.addr %s1806, 2
      %s1808 = smul.addr %s1807, 8
      %s1809 = scalar_lea.vmem %s6, %s1808
      // Predicated region
      $region45: #{tcn_gcn_unit.1} parent=43 // pred_check
        %p1810 = pneg %p166
      $region46: #{tcn_gcn_unit.1} parent=43 // pred_check_branch
        %1812 = sbr.rel (%p1810) target = $region48
      $region47: #{tcn_gcn_unit.1} parent=43 // pred_region
        _
      $region48: #{tcn_gcn_unit.1} parent=43 // pred_fallthru
        _
    $region44: #{tcn_gcn_unit.1} parent=5 // pred_fallthru
      _
    %p1813 = scmp.le.s32.totalorder 2, %s12
    // Predicated region
    $region49: #{tcn_gcn_unit.1} parent=5 // pred_check
      %p1814 = pneg %p1813
    $region50: #{tcn_gcn_unit.1} parent=5 // pred_check_branch
      %1816 = sbr.rel (%p1814) target = $region52
    $region51: #{tcn_gcn_unit.1} parent=5 // pred_region
      %s1817 = ssub.s32 %s12, 2
      // Predicated region
      $region53: #{tcn_gcn_unit.1} parent=51 // pred_check
        %p1818 = pneg %p172
      $region54: #{tcn_gcn_unit.1} parent=51 // pred_check_branch
        %1820 = sbr.rel (%p1818) target = $region56
      $region55: #{tcn_gcn_unit.1} parent=51 // pred_region
        %p1821 = scmp.lt.s32.totalorder %s18, 1
        %s1822 = scalar_select %p1821, %s18, 1
        %s1823 = smul.addr %s1822, 2
        %s1824 = smul.addr %s1823, 8
        %s1825 = scalar_lea.vmem %s6, %s1824
      $region56: #{tcn_gcn_unit.1} parent=51 // pred_fallthru
        _
    $region52: #{tcn_gcn_unit.1} parent=5 // pred_fallthru
      _
  $region6: #{tcn_gcn_unit.1} parent=0 // loop_footer
    %s16 = sadd.s32 1, %s12
  $region7: #{tcn_gcn_unit.1} parent=0 // loop_footer_branch
    %11 = sbr.rel target = $region3
  $region8: #{tcn_gcn_unit.1} parent=0 // loop_exit
    _

</llo_original>
